<compile_context>
chip_gen: v5e
topology: v5e:2x2
jax: 0.10.0
libtpu: 0.0.40
codegen_flags: <defaults>
</compile_context>

<pallas_src>
import functools

import jax
import jax.numpy as jnp
from jax import lax
from jax.experimental import pallas as pl
from jax.experimental.pallas import tpu as pltpu


def _layernorm(v, g, b, eps=1e-5):
    mu = jnp.mean(v, axis=-1, keepdims=True)
    var = jnp.mean((v - mu) ** 2, axis=-1, keepdims=True)
    return (v - mu) * lax.rsqrt(var + eps) * g + b


def block_kernel(x_ref, ln1_g, ln1_b, wqkv3, wp3, bp,
                 ln2_g, ln2_b, w1, b1, w2, b2, o_ref, *, n_heads):
    H = n_heads
    x = x_ref[...].astype(jnp.float32)               # (T, D) — one batch element
    T, D = x.shape
    hd = D // H
    scale = float(D) ** -0.5          # module scales by full head_dim C (== D here)

    # ---------------- attention branch (dropout == identity) ----------------
    h1 = _layernorm(x, ln1_g[...], ln1_b[...])

    # Batched QKV projection: heads (and q/k/v) stacked on the leading batch
    # axis -> one MXU batched matmul, leading-dim slices only (no lane shuffles).
    h1b = jnp.broadcast_to(h1.astype(jnp.bfloat16)[None], (3 * H, T, D))
    qkv = jnp.einsum('htd,hde->hte', h1b, wqkv3[...],
                     preferred_element_type=jnp.float32)          # (3H, T, hd) f32
    q = qkv[:H]
    k = qkv[H:2 * H]
    v = qkv[2 * H:]

    # Scores: heads stay the dot_general batch dim.
    s = jnp.einsum('hqe,hke->hqk',
                   q.astype(jnp.bfloat16), k.astype(jnp.bfloat16),
                   preferred_element_type=jnp.float32) * scale    # (H, T, T)

    rows = lax.broadcasted_iota(jnp.int32, (T, T), 0)
    cols = lax.broadcasted_iota(jnp.int32, (T, T), 1)
    causal = (cols <= rows)[None]                                 # (1, T, T)
    s = jnp.where(causal, s, -1e30)        # finite fill avoids -inf/NaN hazards
    s = s - jnp.max(s, axis=-1, keepdims=True)
    p = jnp.exp(s)                                                # f32 probs (unnorm.)
    denom = jnp.sum(p, axis=-1, keepdims=True)                    # (H, T, 1)
    r = pl.reciprocal(denom, approx=True)                         # EUP reciprocal
    r = r * (2.0 - denom * r)              # one Newton step -> full f32 accuracy

    # Deferred normalization: scale the (H,T,hd) P@V result, not (H,T,T) probs.
    o = jnp.einsum('hqk,hke->hqe',
                   p.astype(jnp.bfloat16), v.astype(jnp.bfloat16),
                   preferred_element_type=jnp.float32) * r        # (H, T, hd)

    # Head re-assembly folded into the output projection:
    #   concat_h(o_h) @ Wp == sum_h o_h @ Wp[h*hd:(h+1)*hd, :]
    att = jnp.einsum('hte,hed->htd',
                     o.astype(jnp.bfloat16), wp3[...],
                     preferred_element_type=jnp.float32).sum(axis=0) + bp[...]
    x1 = x + att

    # ---------------- feed-forward branch (dropout == identity) ----------------
    h2 = _layernorm(x1, ln2_g[...], ln2_b[...])
    f = jnp.dot(h2.astype(jnp.bfloat16), w1[...],
                preferred_element_type=jnp.float32) + b1[...]
    f = jnp.maximum(f, 0.0)                                       # ReLU
    f = jnp.dot(f.astype(jnp.bfloat16), w2[...],
                preferred_element_type=jnp.float32) + b2[...]

    o_ref[...] = (x1 + f).astype(o_ref.dtype)


def prepare_params(params, n_heads):
    """One-time host-side repack: head-batched bf16 weights (outside jit)."""
    D = params["wq"].shape[0]
    H = n_heads
    hd = D // H

    def to_heads(w):                      # (D, D) -> (H, D, hd): head-major columns
        return w.reshape(D, H, hd).transpose(1, 0, 2)

    w_qkv3 = jnp.concatenate(
        [to_heads(params["wq"]), to_heads(params["wk"]), to_heads(params["wv"])],
        axis=0).astype(jnp.bfloat16)                              # (3H, D, hd)
    wp3 = params["wp"].reshape(H, hd, D).astype(jnp.bfloat16)     # (H, hd, D)

    return dict(
        ln1_g=params["ln1_g"], ln1_b=params["ln1_b"],
        w_qkv3=w_qkv3, wp3=wp3, bp=params["bp"],
        ln2_g=params["ln2_g"], ln2_b=params["ln2_b"],
        w1=params["w1"].astype(jnp.bfloat16), b1=params["b1"],
        w2=params["w2"].astype(jnp.bfloat16), b2=params["b2"],
    )


@functools.partial(jax.jit, static_argnames=("n_heads",))
def block_forward(x, prep, n_heads=4):
    B, T, D = x.shape
    weights = (prep["ln1_g"], prep["ln1_b"], prep["w_qkv3"], prep["wp3"], prep["bp"],
               prep["ln2_g"], prep["ln2_b"], prep["w1"], prep["b1"],
               prep["w2"], prep["b2"])

    def const_spec(w):                    # weights: constant block -> VMEM-resident
        return pl.BlockSpec(w.shape, lambda b, n=w.ndim: (0,) * n)

    in_specs = ([pl.BlockSpec((None, T, D), lambda b: (b, 0, 0))]
                + [const_spec(w) for w in weights])
    out_specs = pl.BlockSpec((None, T, D), lambda b: (b, 0, 0))

    return pl.pallas_call(
        functools.partial(block_kernel, n_heads=n_heads),
        grid=(B,),                         # one batch element per grid step
        out_shape=jax.ShapeDtypeStruct((B, T, D), x.dtype),
        in_specs=in_specs,
        out_specs=out_specs,
        compiler_params=pltpu.CompilerParams(
            dimension_semantics=("parallel",)),   # megacore / 2-TC sharding on v7x
    )(x, *weights)


# -------- pure-JAX reference (mirrors the PyTorch forward) --------
# matmul_dtype=bfloat16 reproduces the kernel's precision policy exactly
# (operands rounded to bf16, f32 accumulation); float32 is the exact module.
def block_reference(x, params, n_heads=4, matmul_dtype=jnp.float32):
    B, T, D = x.shape
    H = n_heads
    hd = D // H
    md = matmul_dtype

    def mm(a, b):
        return jnp.matmul(a.astype(md), b.astype(md),
                          preferred_element_type=jnp.float32)

    def ln(v, g, b):
        mu = jnp.mean(v, -1, keepdims=True)
        var = jnp.mean((v - mu) ** 2, -1, keepdims=True)
        return (v - mu) / jnp.sqrt(var + 1e-5) * g[0] + b[0]

    h = ln(x, params["ln1_g"], params["ln1_b"])
    q = mm(h, params["wq"]).reshape(B, T, H, hd).transpose(0, 2, 1, 3)
    k = mm(h, params["wk"]).reshape(B, T, H, hd).transpose(0, 2, 1, 3)
    v = mm(h, params["wv"]).reshape(B, T, H, hd).transpose(0, 2, 1, 3)
    wei = jnp.einsum("bhtd,bhsd->bhts", q.astype(md), k.astype(md),
                     preferred_element_type=jnp.float32) * (D ** -0.5)
    mask = jnp.tril(jnp.ones((T, T), bool))
    wei = jnp.where(mask[None, None], wei, -jnp.inf)
    wei = jax.nn.softmax(wei, axis=-1)
    out = jnp.einsum("bhts,bhsd->bhtd", wei.astype(md), v.astype(md),
                     preferred_element_type=jnp.float32)
    out = out.transpose(0, 2, 1, 3).reshape(B, T, D)
    out = mm(out, params["wp"]) + params["bp"][0]
    x1 = x + out
    h2 = ln(x1, params["ln2_g"], params["ln2_b"])
    f = jnp.maximum(mm(h2, params["w1"]) + params["b1"][0], 0.0)
    f = mm(f, params["w2"]) + params["b2"][0]
    return x1 + f


def init_params(key, n_embd, head_dim):
    D = head_dim
    ks = jax.random.split(key, 10)

    def lin(k, din, dout):
        return jax.random.normal(k, (din, dout), jnp.float32) * (din ** -0.5)

    return dict(
        ln1_g=jnp.ones((1, D), jnp.float32) + 0.1 * jax.random.normal(ks[6], (1, D)),
        ln1_b=0.1 * jax.random.normal(ks[7], (1, D)),
        wq=lin(ks[0], n_embd, D),
        wk=lin(ks[1], n_embd, D),
        wv=lin(ks[2], n_embd, D),
        wp=lin(ks[3], D, D),
        bp=0.1 * jax.random.normal(ks[8], (1, D)),
        ln2_g=jnp.ones((1, D), jnp.float32),
        ln2_b=jnp.zeros((1, D), jnp.float32),
        w1=lin(ks[4], D, 4 * D),
        b1=0.1 * jax.random.normal(ks[9], (1, 4 * D)),
        w2=lin(ks[5], 4 * D, D),
        b2=jnp.zeros((1, D), jnp.float32),
    )


if __name__ == "__main__":
    # Module constraint: the residual add implies n_embd == head_dim.
    B, T = 2, 8
    n_embd = head_dim = 32
    n_heads = 4

    key = jax.random.PRNGKey(0)
    kx, kp = jax.random.split(key)
    x = jax.random.normal(kx, (B, T, n_embd), jnp.float32)
    params = init_params(kp, n_embd, head_dim)
    prep = prepare_params(params, n_heads)     # one-time weight repack + bf16 cast

    out = block_forward(x, prep, n_heads=n_heads)
    out = jax.block_until_ready(out)
    assert out.shape == (B, T, head_dim)
    assert bool(jnp.all(jnp.isfinite(out)))

    # Precision-matched reference (same bf16-operand / f32-accumulate policy):
    ref_bf16 = block_reference(x, params, n_heads=n_heads, matmul_dtype=jnp.bfloat16)
    err_matched = float(jnp.max(jnp.abs(out - ref_bf16)))
    assert jnp.allclose(out, ref_bf16, atol=3e-2, rtol=3e-2), err_matched

    # Exact f32 module semantics (looser: includes bf16 quantization of the MXU
    # operands requested by the perf review).
    ref_f32 = block_reference(x, params, n_heads=n_heads, matmul_dtype=jnp.float32)
    err_f32 = float(jnp.max(jnp.abs(out - ref_f32)))
    assert jnp.allclose(out, ref_f32, atol=1.5e-1, rtol=1.5e-1), err_f32

    # TODO(synk): dropout layers are implemented as identity (inference mode);
    # training-mode stochastic dropout is not reproduced.
    print("KERNEL_OK")
</pallas_src>

<mosaic_0001>
module attributes {stable_mosaic.version = 11 : i64} {
  func.func @block_kernel(%arg0: i32, %arg1: memref<1x8x32xf32, #tpu.memory_space<vmem>>, %arg2: memref<1x32xf32, #tpu.memory_space<vmem>>, %arg3: memref<1x32xf32, #tpu.memory_space<vmem>>, %arg4: memref<12x32x8xbf16, #tpu.memory_space<vmem>>, %arg5: memref<4x8x32xbf16, #tpu.memory_space<vmem>>, %arg6: memref<1x32xf32, #tpu.memory_space<vmem>>, %arg7: memref<1x32xf32, #tpu.memory_space<vmem>>, %arg8: memref<1x32xf32, #tpu.memory_space<vmem>>, %arg9: memref<32x128xbf16, #tpu.memory_space<vmem>>, %arg10: memref<1x128xf32, #tpu.memory_space<vmem>>, %arg11: memref<128x32xbf16, #tpu.memory_space<vmem>>, %arg12: memref<1x32xf32, #tpu.memory_space<vmem>>, %arg13: memref<1x8x32xf32, #tpu.memory_space<vmem>>) attributes {dimension_semantics = [#tpu.dimension_semantics<parallel>], iteration_bounds = array<i64: 2>, scalar_prefetch = 0 : i64, scratch_operands = 0 : i64, tpu.core_type = #tpu.core_type<tc>, window_params = [{transform_indices = @transform_0, window_bounds = array<i64: 1, 8, 32>}, {pipeline_mode = #tpu.pipeline_mode<synchronous>, transform_indices = @transform_1, window_bounds = array<i64: 1, 32>}, {pipeline_mode = #tpu.pipeline_mode<synchronous>, transform_indices = @transform_2, window_bounds = array<i64: 1, 32>}, {pipeline_mode = #tpu.pipeline_mode<synchronous>, transform_indices = @transform_3, window_bounds = array<i64: 12, 32, 8>}, {pipeline_mode = #tpu.pipeline_mode<synchronous>, transform_indices = @transform_4, window_bounds = array<i64: 4, 8, 32>}, {pipeline_mode = #tpu.pipeline_mode<synchronous>, transform_indices = @transform_5, window_bounds = array<i64: 1, 32>}, {pipeline_mode = #tpu.pipeline_mode<synchronous>, transform_indices = @transform_6, window_bounds = array<i64: 1, 32>}, {pipeline_mode = #tpu.pipeline_mode<synchronous>, transform_indices = @transform_7, window_bounds = array<i64: 1, 32>}, {pipeline_mode = #tpu.pipeline_mode<synchronous>, transform_indices = @transform_8, window_bounds = array<i64: 32, 128>}, {pipeline_mode = #tpu.pipeline_mode<synchronous>, transform_indices = @transform_9, window_bounds = array<i64: 1, 128>}, {pipeline_mode = #tpu.pipeline_mode<synchronous>, transform_indices = @transform_10, window_bounds = array<i64: 128, 32>}, {pipeline_mode = #tpu.pipeline_mode<synchronous>, transform_indices = @transform_11, window_bounds = array<i64: 1, 32>}, {transform_indices = @transform_12, window_bounds = array<i64: 1, 8, 32>}]} {
    %c0 = arith.constant 0 : index
    %c0_0 = arith.constant 0 : index
    %c0_1 = arith.constant 0 : index
    %0 = vector.load %arg1[%c0, %c0_0, %c0_1] : memref<1x8x32xf32, #tpu.memory_space<vmem>>, vector<1x8x32xf32>
    %1 = vector.shape_cast %0 : vector<1x8x32xf32> to vector<8x32xf32>
    %c0_2 = arith.constant 0 : index
    %c0_3 = arith.constant 0 : index
    %2 = vector.load %arg2[%c0_2, %c0_3] : memref<1x32xf32, #tpu.memory_space<vmem>>, vector<1x32xf32>
    %c0_4 = arith.constant 0 : index
    %c0_5 = arith.constant 0 : index
    %3 = vector.load %arg3[%c0_4, %c0_5] : memref<1x32xf32, #tpu.memory_space<vmem>>, vector<1x32xf32>
    %cst = arith.constant dense<0.000000e+00> : vector<8xf32>
    %4 = vector.multi_reduction <add>, %1, %cst [1] : vector<8x32xf32> to vector<8xf32>
    %5 = vector.shape_cast %4 : vector<8xf32> to vector<8x1xf32>
    %cst_6 = arith.constant 3.200000e+01 : f32
    %6 = vector.broadcast %cst_6 : f32 to vector<8x1xf32>
    %7 = arith.divf %5, %6 : vector<8x1xf32>
    %8 = vector.broadcast %7 : vector<8x1xf32> to vector<8x32xf32>
    %9 = arith.subf %1, %8 : vector<8x32xf32>
    %10 = arith.mulf %9, %9 : vector<8x32xf32>
    %cst_7 = arith.constant dense<0.000000e+00> : vector<8xf32>
    %11 = vector.multi_reduction <add>, %10, %cst_7 [1] : vector<8x32xf32> to vector<8xf32>
    %12 = vector.shape_cast %11 : vector<8xf32> to vector<8x1xf32>
    %cst_8 = arith.constant 3.200000e+01 : f32
    %13 = vector.broadcast %cst_8 : f32 to vector<8x1xf32>
    %14 = arith.divf %12, %13 : vector<8x1xf32>
    %15 = vector.broadcast %7 : vector<8x1xf32> to vector<8x32xf32>
    %16 = arith.subf %1, %15 : vector<8x32xf32>
    %cst_9 = arith.constant 9.99999974E-6 : f32
    %17 = vector.broadcast %cst_9 : f32 to vector<8x1xf32>
    %18 = arith.addf %14, %17 : vector<8x1xf32>
    %19 = math.rsqrt %18 : vector<8x1xf32>
    %20 = vector.broadcast %19 : vector<8x1xf32> to vector<8x32xf32>
    %21 = arith.mulf %16, %20 : vector<8x32xf32>
    %22 = vector.broadcast %2 : vector<1x32xf32> to vector<8x32xf32>
    %23 = arith.mulf %21, %22 : vector<8x32xf32>
    %24 = vector.broadcast %3 : vector<1x32xf32> to vector<8x32xf32>
    %25 = arith.addf %23, %24 : vector<8x32xf32>
    %26 = arith.truncf %25 : vector<8x32xf32> to vector<8x32xbf16>
    %27 = vector.shape_cast %26 : vector<8x32xbf16> to vector<1x8x32xbf16>
    %28 = vector.shape_cast %27 : vector<1x8x32xbf16> to vector<1x8x32xbf16>
    %29 = vector.broadcast %28 : vector<1x8x32xbf16> to vector<12x8x32xbf16>
    %c0_10 = arith.constant 0 : index
    %c0_11 = arith.constant 0 : index
    %c0_12 = arith.constant 0 : index
    %30 = vector.load %arg4[%c0_10, %c0_11, %c0_12] : memref<12x32x8xbf16, #tpu.memory_space<vmem>>, vector<12x32x8xbf16>
    "tpu.trace_start"() <{level = 10 : i32, message = "htd,hde->hte"}> : () -> ()
    %cst_13 = arith.constant dense<0.000000e+00> : vector<12x8x8xf32>
    %31 = tpu.matmul %29, %30, %cst_13 {dimension_numbers = #tpu.dot_dimension_numbers<[2], [1], [1], [2], [0, 0, 0, 1, 1, 2], [0], [0]>} : vector<12x8x32xbf16>, vector<12x32x8xbf16>, vector<12x8x8xf32> -> vector<12x8x8xf32>
    "tpu.trace_stop"() : () -> ()
    %32 = vector.extract_strided_slice %31 {offsets = [0, 0, 0], sizes = [4, 8, 8], strides = [1, 1, 1]} : vector<12x8x8xf32> to vector<4x8x8xf32>
    %33 = vector.extract_strided_slice %31 {offsets = [4, 0, 0], sizes = [4, 8, 8], strides = [1, 1, 1]} : vector<12x8x8xf32> to vector<4x8x8xf32>
    %34 = vector.extract_strided_slice %31 {offsets = [8, 0, 0], sizes = [4, 8, 8], strides = [1, 1, 1]} : vector<12x8x8xf32> to vector<4x8x8xf32>
    %35 = arith.truncf %32 : vector<4x8x8xf32> to vector<4x8x8xbf16>
    %36 = arith.truncf %33 : vector<4x8x8xf32> to vector<4x8x8xbf16>
    "tpu.trace_start"() <{level = 10 : i32, message = "hqe,hke->hqk"}> : () -> ()
    %cst_14 = arith.constant dense<0.000000e+00> : vector<4x8x8xf32>
    %37 = tpu.matmul %35, %36, %cst_14 {dimension_numbers = #tpu.dot_dimension_numbers<[2], [2], [1], [1], [0, 0, 0, 1, 1, 1], [0], [0]>} : vector<4x8x8xbf16>, vector<4x8x8xbf16>, vector<4x8x8xf32> -> vector<4x8x8xf32>
    "tpu.trace_stop"() : () -> ()
    %cst_15 = arith.constant 0.176776692 : f32
    %38 = vector.broadcast %cst_15 : f32 to vector<4x8x8xf32>
    %39 = arith.mulf %37, %38 : vector<4x8x8xf32>
    %40 = tpu.iota {dimensions = array<i32: 0>} : vector<8x8xi32>
    %41 = tpu.iota {dimensions = array<i32: 1>} : vector<8x8xi32>
    %42 = arith.cmpi sle, %41, %40 : vector<8x8xi32>
    %43 = vector.shape_cast %42 : vector<8x8xi1> to vector<1x8x8xi1>
    %cst_16 = arith.constant -1.000000e+30 : f32
    %44 = vector.shape_cast %43 : vector<1x8x8xi1> to vector<1x8x8xi1>
    %45 = vector.broadcast %44 : vector<1x8x8xi1> to vector<4x8x8xi1>
    %46 = vector.broadcast %cst_16 : f32 to vector<4x8x8xf32>
    %47 = arith.select %45, %39, %46 : vector<4x8x8xi1>, vector<4x8x8xf32>
    %cst_17 = arith.constant dense<0xFF800000> : vector<4x8xf32>
    %48 = vector.multi_reduction <maximumf>, %47, %cst_17 [2] : vector<4x8x8xf32> to vector<4x8xf32>
    %49 = vector.shape_cast %48 : vector<4x8xf32> to vector<4x8x1xf32>
    %50 = vector.broadcast %49 : vector<4x8x1xf32> to vector<4x8x8xf32>
    %51 = arith.subf %47, %50 : vector<4x8x8xf32>
    %52 = math.exp %51 : vector<4x8x8xf32>
    %cst_18 = arith.constant dense<0.000000e+00> : vector<4x8xf32>
    %53 = vector.multi_reduction <add>, %52, %cst_18 [2] : vector<4x8x8xf32> to vector<4x8xf32>
    %54 = vector.shape_cast %53 : vector<4x8xf32> to vector<4x8x1xf32>
    %55 = tpu.reciprocal %54 {approx = true} : vector<4x8x1xf32> -> vector<4x8x1xf32>
    %56 = arith.mulf %54, %55 : vector<4x8x1xf32>
    %cst_19 = arith.constant 2.000000e+00 : f32
    %57 = vector.broadcast %cst_19 : f32 to vector<4x8x1xf32>
    %58 = arith.subf %57, %56 : vector<4x8x1xf32>
    %59 = arith.mulf %55, %58 : vector<4x8x1xf32>
    %60 = arith.truncf %52 : vector<4x8x8xf32> to vector<4x8x8xbf16>
    %61 = arith.truncf %34 : vector<4x8x8xf32> to vector<4x8x8xbf16>
    "tpu.trace_start"() <{level = 10 : i32, message = "hqk,hke->hqe"}> : () -> ()
    %cst_20 = arith.constant dense<0.000000e+00> : vector<4x8x8xf32>
    %62 = tpu.matmul %60, %61, %cst_20 {dimension_numbers = #tpu.dot_dimension_numbers<[2], [1], [1], [2], [0, 0, 0, 1, 1, 2], [0], [0]>} : vector<4x8x8xbf16>, vector<4x8x8xbf16>, vector<4x8x8xf32> -> vector<4x8x8xf32>
    "tpu.trace_stop"() : () -> ()
    %63 = vector.broadcast %59 : vector<4x8x1xf32> to vector<4x8x8xf32>
    %64 = arith.mulf %62, %63 : vector<4x8x8xf32>
    %65 = arith.truncf %64 : vector<4x8x8xf32> to vector<4x8x8xbf16>
    %c0_21 = arith.constant 0 : index
    %c0_22 = arith.constant 0 : index
    %c0_23 = arith.constant 0 : index
    %66 = vector.load %arg5[%c0_21, %c0_22, %c0_23] : memref<4x8x32xbf16, #tpu.memory_space<vmem>>, vector<4x8x32xbf16>
    "tpu.trace_start"() <{level = 10 : i32, message = "hte,hed->htd"}> : () -> ()
    %cst_24 = arith.constant dense<0.000000e+00> : vector<4x8x32xf32>
    %67 = tpu.matmul %65, %66, %cst_24 {dimension_numbers = #tpu.dot_dimension_numbers<[2], [1], [1], [2], [0, 0, 0, 1, 1, 2], [0], [0]>} : vector<4x8x8xbf16>, vector<4x8x32xbf16>, vector<4x8x32xf32> -> vector<4x8x32xf32>
    "tpu.trace_stop"() : () -> ()
    %cst_25 = arith.constant dense<0.000000e+00> : vector<8x32xf32>
    %68 = vector.multi_reduction <add>, %67, %cst_25 [0] : vector<4x8x32xf32> to vector<8x32xf32>
    %c0_26 = arith.constant 0 : index
    %c0_27 = arith.constant 0 : index
    %69 = vector.load %arg6[%c0_26, %c0_27] : memref<1x32xf32, #tpu.memory_space<vmem>>, vector<1x32xf32>
    %70 = vector.broadcast %69 : vector<1x32xf32> to vector<8x32xf32>
    %71 = arith.addf %68, %70 : vector<8x32xf32>
    %72 = arith.addf %1, %71 : vector<8x32xf32>
    %c0_28 = arith.constant 0 : index
    %c0_29 = arith.constant 0 : index
    %73 = vector.load %arg7[%c0_28, %c0_29] : memref<1x32xf32, #tpu.memory_space<vmem>>, vector<1x32xf32>
    %c0_30 = arith.constant 0 : index
    %c0_31 = arith.constant 0 : index
    %74 = vector.load %arg8[%c0_30, %c0_31] : memref<1x32xf32, #tpu.memory_space<vmem>>, vector<1x32xf32>
    %cst_32 = arith.constant dense<0.000000e+00> : vector<8xf32>
    %75 = vector.multi_reduction <add>, %72, %cst_32 [1] : vector<8x32xf32> to vector<8xf32>
    %76 = vector.shape_cast %75 : vector<8xf32> to vector<8x1xf32>
    %cst_33 = arith.constant 3.200000e+01 : f32
    %77 = vector.broadcast %cst_33 : f32 to vector<8x1xf32>
    %78 = arith.divf %76, %77 : vector<8x1xf32>
    %79 = vector.broadcast %78 : vector<8x1xf32> to vector<8x32xf32>
    %80 = arith.subf %72, %79 : vector<8x32xf32>
    %81 = arith.mulf %80, %80 : vector<8x32xf32>
    %cst_34 = arith.constant dense<0.000000e+00> : vector<8xf32>
    %82 = vector.multi_reduction <add>, %81, %cst_34 [1] : vector<8x32xf32> to vector<8xf32>
    %83 = vector.shape_cast %82 : vector<8xf32> to vector<8x1xf32>
    %cst_35 = arith.constant 3.200000e+01 : f32
    %84 = vector.broadcast %cst_35 : f32 to vector<8x1xf32>
    %85 = arith.divf %83, %84 : vector<8x1xf32>
    %86 = vector.broadcast %78 : vector<8x1xf32> to vector<8x32xf32>
    %87 = arith.subf %72, %86 : vector<8x32xf32>
    %cst_36 = arith.constant 9.99999974E-6 : f32
    %88 = vector.broadcast %cst_36 : f32 to vector<8x1xf32>
    %89 = arith.addf %85, %88 : vector<8x1xf32>
    %90 = math.rsqrt %89 : vector<8x1xf32>
    %91 = vector.broadcast %90 : vector<8x1xf32> to vector<8x32xf32>
    %92 = arith.mulf %87, %91 : vector<8x32xf32>
    %93 = vector.broadcast %73 : vector<1x32xf32> to vector<8x32xf32>
    %94 = arith.mulf %92, %93 : vector<8x32xf32>
    %95 = vector.broadcast %74 : vector<1x32xf32> to vector<8x32xf32>
    %96 = arith.addf %94, %95 : vector<8x32xf32>
    %97 = arith.truncf %96 : vector<8x32xf32> to vector<8x32xbf16>
    %c0_37 = arith.constant 0 : index
    %c0_38 = arith.constant 0 : index
    %98 = vector.load %arg9[%c0_37, %c0_38] : memref<32x128xbf16, #tpu.memory_space<vmem>>, vector<32x128xbf16>
    %cst_39 = arith.constant dense<0.000000e+00> : vector<8x128xf32>
    %99 = tpu.matmul %97, %98, %cst_39 {dimension_numbers = #tpu.dot_dimension_numbers<[1], [0], [0], [1], [0, 0, 1, 1], [], []>} : vector<8x32xbf16>, vector<32x128xbf16>, vector<8x128xf32> -> vector<8x128xf32>
    %c0_40 = arith.constant 0 : index
    %c0_41 = arith.constant 0 : index
    %100 = vector.load %arg10[%c0_40, %c0_41] : memref<1x128xf32, #tpu.memory_space<vmem>>, vector<1x128xf32>
    %101 = vector.broadcast %100 : vector<1x128xf32> to vector<8x128xf32>
    %102 = arith.addf %99, %101 : vector<8x128xf32>
    %cst_42 = arith.constant 0.000000e+00 : f32
    %103 = vector.broadcast %cst_42 : f32 to vector<8x128xf32>
    %104 = arith.maximumf %102, %103 : vector<8x128xf32>
    %105 = arith.truncf %104 : vector<8x128xf32> to vector<8x128xbf16>
    %c0_43 = arith.constant 0 : index
    %c0_44 = arith.constant 0 : index
    %106 = vector.load %arg11[%c0_43, %c0_44] : memref<128x32xbf16, #tpu.memory_space<vmem>>, vector<128x32xbf16>
    %cst_45 = arith.constant dense<0.000000e+00> : vector<8x32xf32>
    %107 = tpu.matmul %105, %106, %cst_45 {dimension_numbers = #tpu.dot_dimension_numbers<[1], [0], [0], [1], [0, 0, 1, 1], [], []>} : vector<8x128xbf16>, vector<128x32xbf16>, vector<8x32xf32> -> vector<8x32xf32>
    %c0_46 = arith.constant 0 : index
    %c0_47 = arith.constant 0 : index
    %108 = vector.load %arg12[%c0_46, %c0_47] : memref<1x32xf32, #tpu.memory_space<vmem>>, vector<1x32xf32>
    %109 = vector.broadcast %108 : vector<1x32xf32> to vector<8x32xf32>
    %110 = arith.addf %107, %109 : vector<8x32xf32>
    %111 = arith.addf %72, %110 : vector<8x32xf32>
    %c0_48 = arith.constant 0 : index
    %c0_49 = arith.constant 0 : index
    %c0_50 = arith.constant 0 : index
    %112 = vector.load %arg13[%c0_48, %c0_49, %c0_50] : memref<1x8x32xf32, #tpu.memory_space<vmem>>, vector<1x8x32xf32>
    %113 = vector.shape_cast %112 : vector<1x8x32xf32> to vector<8x32xf32>
    %114 = vector.shape_cast %111 : vector<8x32xf32> to vector<1x8x32xf32>
    tpu.vector_store %arg13[%c0_48, %c0_49, %c0_50], %114 {strides = array<i32>} : memref<1x8x32xf32, #tpu.memory_space<vmem>>, vector<1x8x32xf32>,
    return
  }
  func.func @transform_0(%arg0: i32) -> (i32, i32, i32) {
    %c0_i32 = arith.constant 0 : i32
    %c0_i32_0 = arith.constant 0 : i32
    %c0_i32_1 = arith.constant 0 : i32
    return %arg0, %c0_i32, %c0_i32_0 : i32, i32, i32
  }
  func.func @transform_1(%arg0: i32) -> (i32, i32) {
    %c0_i32 = arith.constant 0 : i32
    %c0_i32_0 = arith.constant 0 : i32
    %c0_i32_1 = arith.constant 0 : i32
    return %c0_i32, %c0_i32_0 : i32, i32
  }
  func.func @transform_2(%arg0: i32) -> (i32, i32) {
    %c0_i32 = arith.constant 0 : i32
    %c0_i32_0 = arith.constant 0 : i32
    %c0_i32_1 = arith.constant 0 : i32
    return %c0_i32, %c0_i32_0 : i32, i32
  }
  func.func @transform_3(%arg0: i32) -> (i32, i32, i32) {
    %c0_i32 = arith.constant 0 : i32
    %c0_i32_0 = arith.constant 0 : i32
    %c0_i32_1 = arith.constant 0 : i32
    %c0_i32_2 = arith.constant 0 : i32
    return %c0_i32, %c0_i32_0, %c0_i32_1 : i32, i32, i32
  }
  func.func @transform_4(%arg0: i32) -> (i32, i32, i32) {
    %c0_i32 = arith.constant 0 : i32
    %c0_i32_0 = arith.constant 0 : i32
    %c0_i32_1 = arith.constant 0 : i32
    %c0_i32_2 = arith.constant 0 : i32
    return %c0_i32, %c0_i32_0, %c0_i32_1 : i32, i32, i32
  }
  func.func @transform_5(%arg0: i32) -> (i32, i32) {
    %c0_i32 = arith.constant 0 : i32
    %c0_i32_0 = arith.constant 0 : i32
    %c0_i32_1 = arith.constant 0 : i32
    return %c0_i32, %c0_i32_0 : i32, i32
  }
  func.func @transform_6(%arg0: i32) -> (i32, i32) {
    %c0_i32 = arith.constant 0 : i32
    %c0_i32_0 = arith.constant 0 : i32
    %c0_i32_1 = arith.constant 0 : i32
    return %c0_i32, %c0_i32_0 : i32, i32
  }
  func.func @transform_7(%arg0: i32) -> (i32, i32) {
    %c0_i32 = arith.constant 0 : i32
    %c0_i32_0 = arith.constant 0 : i32
    %c0_i32_1 = arith.constant 0 : i32
    return %c0_i32, %c0_i32_0 : i32, i32
  }
  func.func @transform_8(%arg0: i32) -> (i32, i32) {
    %c0_i32 = arith.constant 0 : i32
    %c0_i32_0 = arith.constant 0 : i32
    %c0_i32_1 = arith.constant 0 : i32
    return %c0_i32, %c0_i32_0 : i32, i32
  }
  func.func @transform_9(%arg0: i32) -> (i32, i32) {
    %c0_i32 = arith.constant 0 : i32
    %c0_i32_0 = arith.constant 0 : i32
    %c0_i32_1 = arith.constant 0 : i32
    return %c0_i32, %c0_i32_0 : i32, i32
  }
  func.func @transform_10(%arg0: i32) -> (i32, i32) {
    %c0_i32 = arith.constant 0 : i32
    %c0_i32_0 = arith.constant 0 : i32
    %c0_i32_1 = arith.constant 0 : i32
    return %c0_i32, %c0_i32_0 : i32, i32
  }
  func.func @transform_11(%arg0: i32) -> (i32, i32) {
    %c0_i32 = arith.constant 0 : i32
    %c0_i32_0 = arith.constant 0 : i32
    %c0_i32_1 = arith.constant 0 : i32
    return %c0_i32, %c0_i32_0 : i32, i32
  }
  func.func @transform_12(%arg0: i32) -> (i32, i32, i32) {
    %c0_i32 = arith.constant 0 : i32
    %c0_i32_0 = arith.constant 0 : i32
    %c0_i32_1 = arith.constant 0 : i32
    return %arg0, %c0_i32, %c0_i32_0 : i32, i32, i32
  }
}

</mosaic_0001>

<llo_original>
// kernel: block_forward.1
$region0: #{block_forward.1}
  #allocation0 [shape = 'u32[]', space=smem, size = 0x4, offset = 0x4, fixed_abs, tag = 'smem constant byte address 0x4 - core index']
  #allocation1 [shape = 'u32[72,128]{1,0:T(1,128)}', space=vmem, size = 0x9000, scoped, tag = 'internal scratch']
  %s0 = inlined_call_operand.vmem [shape: f32[2,8,32], index: 0, kind: input, shape index: {}]
  %s1 = inlined_call_operand.vmem [shape: f32[1,32], index: 1, kind: input, shape index: {}]
  %s2 = inlined_call_operand.vmem [shape: f32[1,32], index: 2, kind: input, shape index: {}]
  %s3 = inlined_call_operand.vmem [shape: bf16[12,32,8], index: 3, kind: input, shape index: {}]
  %s4 = inlined_call_operand.vmem [shape: bf16[4,8,32], index: 4, kind: input, shape index: {}]
  %s5 = inlined_call_operand.vmem [shape: f32[1,32], index: 5, kind: input, shape index: {}]
  %s6 = inlined_call_operand.vmem [shape: f32[1,32], index: 6, kind: input, shape index: {}]
  %s7 = inlined_call_operand.vmem [shape: f32[1,32], index: 7, kind: input, shape index: {}]
  %s8 = inlined_call_operand.vmem [shape: bf16[32,128], index: 8, kind: input, shape index: {}]
  %s9 = inlined_call_operand.vmem [shape: f32[1,128], index: 9, kind: input, shape index: {}]
  %s10 = inlined_call_operand.vmem [shape: bf16[128,32], index: 10, kind: input, shape index: {}]
  %s11 = inlined_call_operand.vmem [shape: f32[1,32], index: 11, kind: input, shape index: {}]
  %s12 = inlined_call_operand.hbm [shape: f32[2,8,32], index: 12, kind: output, shape index: {}]
  %s13 = sld [smem:[#allocation0]]
  $region81: #{block_forward.1} parent=0
    _
  %s15 = ssub.s32 1, %s13
  %s16 = scalar_select 0, %s15, %s13
  $region1: #{block_forward.1} parent=0
    #allocation2 [shape = 'u8[8192]{0}', space=vmem, size = 0x2000, scoped, tag = 'output window, operand 0']
    #allocation3 [shape = 's32[2]{0}', space=sflag, size = 0x8, scoped, tag = 'scoped memory for block_forward.1']
    %17 = vsyncpa [#allocation3], 0
    %s18 = scalar_lea.sflag [#allocation3], 1
    %19 = vsyncpa %s18, 0
    loop: start=0, step=1, limit=4
    $region2: #{block_forward.1} parent=1 // loop_pre_header
      _
    $region3: #{block_forward.1} parent=1 // loop_header
      %s21 = sphi 0, %s25
      %p22 = scmp.ge.s32.totalorder %s21, 4
      %s31 = sphi 0, %s33
      %s34 = sphi 0, %s31
      %s35 = sphi 0, %s34
      %s51 = sphi 0, %s35
      %s55 = sphi 0, %s55
      %s57 = sphi 0, %s55
      %s58 = sphi 0, %s57
      %s72 = sphi 0, %s58
      %s76 = sphi 0, %s76
      %s78 = sphi 0, %s76
      %s79 = sphi 0, %s78
      %s93 = sphi 0, %s79
      %s97 = sphi 0, %s97
      %s99 = sphi 0, %s97
      %s100 = sphi 0, %s99
      %s114 = sphi 0, %s100
      %s118 = sphi 0, %s118
      %s120 = sphi 0, %s118
      %s121 = sphi 0, %s120
      %s135 = sphi 0, %s121
      %s139 = sphi 0, %s139
      %s141 = sphi 0, %s139
      %s142 = sphi 0, %s141
      %s156 = sphi 0, %s142
      %s160 = sphi 0, %s160
      %s162 = sphi 0, %s160
      %s163 = sphi 0, %s162
      %s177 = sphi 0, %s163
      %s181 = sphi 0, %s181
      %s183 = sphi 0, %s181
      %s184 = sphi 0, %s183
      %s198 = sphi 0, %s184
      %s202 = sphi 0, %s202
      %s204 = sphi 0, %s202
      %s205 = sphi 0, %s204
      %s219 = sphi 0, %s205
      %s223 = sphi 0, %s223
      %s225 = sphi 0, %s223
      %s226 = sphi 0, %s225
      %s240 = sphi 0, %s226
      %s244 = sphi 0, %s244
      %s246 = sphi 0, %s244
      %s247 = sphi 0, %s246
      %s261 = sphi 0, %s247
      %s265 = sphi 0, %s265
      %s267 = sphi 0, %s265
      %s268 = sphi 0, %s267
      %s282 = sphi 0, %s268
      %s288 = sphi 0, %s290
      %s291 = sphi 0, %s288
      %s292 = sphi 0, %s291
      %s308 = sphi 0, %s292
    $region4: #{block_forward.1} parent=1 // loop_header_branch
      %24 = sbr.rel (%p22) target = $region8
    $region5: #{block_forward.1} parent=1 // loop_body
      %s26 = ssub.s32 %s21, 1
      %s27 = ssub.s32 %s21, 2
      %s28 = sadd.s32 %s21, 1
      %s29 = ssub.s32 %s21, %s28
      %p30 = scmp.eq.s32.totalorder %s29, 0
      %s32 = sadd.s32 %s31, 1
      %s33 = scalar_select %p30, %s31, %s32
      %p36 = pneg %p30
      %p37 = scmp.eq.s32.totalorder %s21, 1
      %p38 = por %p36, %p37
      %p39 = scmp.ne.s32.totalorder %s31, %s34
      %p40 = scmp.eq.s32.totalorder %s21, 0
      %p41 = por %p39, %p40
      %p42 = scmp.ne.s32.totalorder %s31, %s34
      %p43 = scmp.eq.s32.totalorder %s26, 1
      %p44 = por %p42, %p43
      %p45 = scmp.ne.s32.totalorder %s34, %s35
      %p46 = scmp.eq.s32.totalorder %s26, 0
      %p47 = por %p45, %p46
      %p48 = scmp.ne.s32.totalorder %s34, %s35
      %p49 = scmp.eq.s32.totalorder %s27, 1
      %p50 = por %p48, %p49
      %p52 = scmp.ne.s32.totalorder %s35, %s51
      %p53 = scmp.eq.s32.totalorder %s27, 0
      %p54 = por %p52, %p53
      %s56 = sadd.s32 %s55, 1
      %p59 = scmp.eq.s32.totalorder %s21, 1
      %p60 = scmp.ne.s32.totalorder %s55, %s57
      %p61 = scmp.eq.s32.totalorder %s21, 0
      %p62 = por %p60, %p61
      %p63 = scmp.ne.s32.totalorder %s55, %s57
      %p64 = scmp.eq.s32.totalorder %s26, 1
      %p65 = por %p63, %p64
      %p66 = scmp.ne.s32.totalorder %s57, %s58
      %p67 = scmp.eq.s32.totalorder %s26, 0
      %p68 = por %p66, %p67
      %p69 = scmp.ne.s32.totalorder %s57, %s58
      %p70 = scmp.eq.s32.totalorder %s27, 1
      %p71 = por %p69, %p70
      %p73 = scmp.ne.s32.totalorder %s58, %s72
      %p74 = scmp.eq.s32.totalorder %s27, 0
      %p75 = por %p73, %p74
      %s77 = sadd.s32 %s76, 1
      %p80 = scmp.eq.s32.totalorder %s21, 1
      %p81 = scmp.ne.s32.totalorder %s76, %s78
      %p82 = scmp.eq.s32.totalorder %s21, 0
      %p83 = por %p81, %p82
      %p84 = scmp.ne.s32.totalorder %s76, %s78
      %p85 = scmp.eq.s32.totalorder %s26, 1
      %p86 = por %p84, %p85
      %p87 = scmp.ne.s32.totalorder %s78, %s79
      %p88 = scmp.eq.s32.totalorder %s26, 0
      %p89 = por %p87, %p88
      %p90 = scmp.ne.s32.totalorder %s78, %s79
      %p91 = scmp.eq.s32.totalorder %s27, 1
      %p92 = por %p90, %p91
      %p94 = scmp.ne.s32.totalorder %s79, %s93
      %p95 = scmp.eq.s32.totalorder %s27, 0
      %p96 = por %p94, %p95
      %s98 = sadd.s32 %s97, 1
      %p101 = scmp.eq.s32.totalorder %s21, 1
      %p102 = scmp.ne.s32.totalorder %s97, %s99
      %p103 = scmp.eq.s32.totalorder %s21, 0
      %p104 = por %p102, %p103
      %p105 = scmp.ne.s32.totalorder %s97, %s99
      %p106 = scmp.eq.s32.totalorder %s26, 1
      %p107 = por %p105, %p106
      %p108 = scmp.ne.s32.totalorder %s99, %s100
      %p109 = scmp.eq.s32.totalorder %s26, 0
      %p110 = por %p108, %p109
      %p111 = scmp.ne.s32.totalorder %s99, %s100
      %p112 = scmp.eq.s32.totalorder %s27, 1
      %p113 = por %p111, %p112
      %p115 = scmp.ne.s32.totalorder %s100, %s114
      %p116 = scmp.eq.s32.totalorder %s27, 0
      %p117 = por %p115, %p116
      %s119 = sadd.s32 %s118, 1
      %p122 = scmp.eq.s32.totalorder %s21, 1
      %p123 = scmp.ne.s32.totalorder %s118, %s120
      %p124 = scmp.eq.s32.totalorder %s21, 0
      %p125 = por %p123, %p124
      %p126 = scmp.ne.s32.totalorder %s118, %s120
      %p127 = scmp.eq.s32.totalorder %s26, 1
      %p128 = por %p126, %p127
      %p129 = scmp.ne.s32.totalorder %s120, %s121
      %p130 = scmp.eq.s32.totalorder %s26, 0
      %p131 = por %p129, %p130
      %p132 = scmp.ne.s32.totalorder %s120, %s121
      %p133 = scmp.eq.s32.totalorder %s27, 1
      %p134 = por %p132, %p133
      %p136 = scmp.ne.s32.totalorder %s121, %s135
      %p137 = scmp.eq.s32.totalorder %s27, 0
      %p138 = por %p136, %p137
      %s140 = sadd.s32 %s139, 1
      %p143 = scmp.eq.s32.totalorder %s21, 1
      %p144 = scmp.ne.s32.totalorder %s139, %s141
      %p145 = scmp.eq.s32.totalorder %s21, 0
      %p146 = por %p144, %p145
      %p147 = scmp.ne.s32.totalorder %s139, %s141
      %p148 = scmp.eq.s32.totalorder %s26, 1
      %p149 = por %p147, %p148
      %p150 = scmp.ne.s32.totalorder %s141, %s142
      %p151 = scmp.eq.s32.totalorder %s26, 0
      %p152 = por %p150, %p151
      %p153 = scmp.ne.s32.totalorder %s141, %s142
      %p154 = scmp.eq.s32.totalorder %s27, 1
      %p155 = por %p153, %p154
      %p157 = scmp.ne.s32.totalorder %s142, %s156
      %p158 = scmp.eq.s32.totalorder %s27, 0
      %p159 = por %p157, %p158
      %s161 = sadd.s32 %s160, 1
      %p164 = scmp.eq.s32.totalorder %s21, 1
      %p165 = scmp.ne.s32.totalorder %s160, %s162
      %p166 = scmp.eq.s32.totalorder %s21, 0
      %p167 = por %p165, %p166
      %p168 = scmp.ne.s32.totalorder %s160, %s162
      %p169 = scmp.eq.s32.totalorder %s26, 1
      %p170 = por %p168, %p169
      %p171 = scmp.ne.s32.totalorder %s162, %s163
      %p172 = scmp.eq.s32.totalorder %s26, 0
      %p173 = por %p171, %p172
      %p174 = scmp.ne.s32.totalorder %s162, %s163
      %p175 = scmp.eq.s32.totalorder %s27, 1
      %p176 = por %p174, %p175
      %p178 = scmp.ne.s32.totalorder %s163, %s177
      %p179 = scmp.eq.s32.totalorder %s27, 0
      %p180 = por %p178, %p179
      %s182 = sadd.s32 %s181, 1
      %p185 = scmp.eq.s32.totalorder %s21, 1
      %p186 = scmp.ne.s32.totalorder %s181, %s183
      %p187 = scmp.eq.s32.totalorder %s21, 0
      %p188 = por %p186, %p187
      %p189 = scmp.ne.s32.totalorder %s181, %s183
      %p190 = scmp.eq.s32.totalorder %s26, 1
      %p191 = por %p189, %p190
      %p192 = scmp.ne.s32.totalorder %s183, %s184
      %p193 = scmp.eq.s32.totalorder %s26, 0
      %p194 = por %p192, %p193
      %p195 = scmp.ne.s32.totalorder %s183, %s184
      %p196 = scmp.eq.s32.totalorder %s27, 1
      %p197 = por %p195, %p196
      %p199 = scmp.ne.s32.totalorder %s184, %s198
      %p200 = scmp.eq.s32.totalorder %s27, 0
      %p201 = por %p199, %p200
      %s203 = sadd.s32 %s202, 1
      %p206 = scmp.eq.s32.totalorder %s21, 1
      %p207 = scmp.ne.s32.totalorder %s202, %s204
      %p208 = scmp.eq.s32.totalorder %s21, 0
      %p209 = por %p207, %p208
      %p210 = scmp.ne.s32.totalorder %s202, %s204
      %p211 = scmp.eq.s32.totalorder %s26, 1
      %p212 = por %p210, %p211
      %p213 = scmp.ne.s32.totalorder %s204, %s205
      %p214 = scmp.eq.s32.totalorder %s26, 0
      %p215 = por %p213, %p214
      %p216 = scmp.ne.s32.totalorder %s204, %s205
      %p217 = scmp.eq.s32.totalorder %s27, 1
      %p218 = por %p216, %p217
      %p220 = scmp.ne.s32.totalorder %s205, %s219
      %p221 = scmp.eq.s32.totalorder %s27, 0
      %p222 = por %p220, %p221
      %s224 = sadd.s32 %s223, 1
      %p227 = scmp.eq.s32.totalorder %s21, 1
      %p228 = scmp.ne.s32.totalorder %s223, %s225
      %p229 = scmp.eq.s32.totalorder %s21, 0
      %p230 = por %p228, %p229
      %p231 = scmp.ne.s32.totalorder %s223, %s225
      %p232 = scmp.eq.s32.totalorder %s26, 1
      %p233 = por %p231, %p232
      %p234 = scmp.ne.s32.totalorder %s225, %s226
      %p235 = scmp.eq.s32.totalorder %s26, 0
      %p236 = por %p234, %p235
      %p237 = scmp.ne.s32.totalorder %s225, %s226
      %p238 = scmp.eq.s32.totalorder %s27, 1
      %p239 = por %p237, %p238
      %p241 = scmp.ne.s32.totalorder %s226, %s240
      %p242 = scmp.eq.s32.totalorder %s27, 0
      %p243 = por %p241, %p242
      %s245 = sadd.s32 %s244, 1
      %p248 = scmp.eq.s32.totalorder %s21, 1
      %p249 = scmp.ne.s32.totalorder %s244, %s246
      %p250 = scmp.eq.s32.totalorder %s21, 0
      %p251 = por %p249, %p250
      %p252 = scmp.ne.s32.totalorder %s244, %s246
      %p253 = scmp.eq.s32.totalorder %s26, 1
      %p254 = por %p252, %p253
      %p255 = scmp.ne.s32.totalorder %s246, %s247
      %p256 = scmp.eq.s32.totalorder %s26, 0
      %p257 = por %p255, %p256
      %p258 = scmp.ne.s32.totalorder %s246, %s247
      %p259 = scmp.eq.s32.totalorder %s27, 1
      %p260 = por %p258, %p259
      %p262 = scmp.ne.s32.totalorder %s247, %s261
      %p263 = scmp.eq.s32.totalorder %s27, 0
      %p264 = por %p262, %p263
      %s266 = sadd.s32 %s265, 1
      %p269 = scmp.eq.s32.totalorder %s21, 1
      %p270 = scmp.ne.s32.totalorder %s265, %s267
      %p271 = scmp.eq.s32.totalorder %s21, 0
      %p272 = por %p270, %p271
      %p273 = scmp.ne.s32.totalorder %s265, %s267
      %p274 = scmp.eq.s32.totalorder %s26, 1
      %p275 = por %p273, %p274
      %p276 = scmp.ne.s32.totalorder %s267, %s268
      %p277 = scmp.eq.s32.totalorder %s26, 0
      %p278 = por %p276, %p277
      %p279 = scmp.ne.s32.totalorder %s267, %s268
      %p280 = scmp.eq.s32.totalorder %s27, 1
      %p281 = por %p279, %p280
      %p283 = scmp.ne.s32.totalorder %s268, %s282
      %p284 = scmp.eq.s32.totalorder %s27, 0
      %p285 = por %p283, %p284
      %s286 = ssub.s32 %s21, %s28
      %p287 = scmp.eq.s32.totalorder %s286, 0
      %s289 = sadd.s32 %s288, 1
      %s290 = scalar_select %p287, %s288, %s289
      %p293 = pneg %p287
      %p294 = scmp.eq.s32.totalorder %s21, 1
      %p295 = por %p293, %p294
      %p296 = scmp.ne.s32.totalorder %s288, %s291
      %p297 = scmp.eq.s32.totalorder %s21, 0
      %p298 = por %p296, %p297
      %p299 = scmp.ne.s32.totalorder %s288, %s291
      %p300 = scmp.eq.s32.totalorder %s26, 1
      %p301 = por %p299, %p300
      %p302 = scmp.ne.s32.totalorder %s291, %s292
      %p303 = scmp.eq.s32.totalorder %s26, 0
      %p304 = por %p302, %p303
      %p305 = scmp.ne.s32.totalorder %s291, %s292
      %p306 = scmp.eq.s32.totalorder %s27, 1
      %p307 = por %p305, %p306
      %p309 = scmp.ne.s32.totalorder %s292, %s308
      %p310 = scmp.eq.s32.totalorder %s27, 0
      %p311 = por %p309, %p310
      %p312 = scmp.le.s32.totalorder 1, %s21
      %p313 = scmp.lt.s32.totalorder %s21, 3
      %p314 = pnand %p312, %p313
      %p315 = pneg %p314
      // Predicated region
      $region9: #{block_forward.1} parent=5 // pred_check
        _
      $region10: #{block_forward.1} parent=5 // pred_check_branch
        %317 = sbr.rel (%p314) target = $region12
      $region11: #{block_forward.1} parent=5 // pred_region
        %s318 = ssub.s32 %s21, 1
        // Predicated region
        $region13: #{block_forward.1} parent=11 // pred_check
          %p319 = pneg %p68
        $region14: #{block_forward.1} parent=11 // pred_check_branch
          %321 = sbr.rel (%p319) target = $region16
        $region15: #{block_forward.1} parent=11 // pred_region
          _
        $region16: #{block_forward.1} parent=11 // pred_fallthru
          _
        // Predicated region
        $region17: #{block_forward.1} parent=11 // pred_check
          %p322 = pneg %p89
        $region18: #{block_forward.1} parent=11 // pred_check_branch
          %324 = sbr.rel (%p322) target = $region20
        $region19: #{block_forward.1} parent=11 // pred_region
          _
        $region20: #{block_forward.1} parent=11 // pred_fallthru
          _
        // Predicated region
        $region21: #{block_forward.1} parent=11 // pred_check
          %p325 = pneg %p110
        $region22: #{block_forward.1} parent=11 // pred_check_branch
          %327 = sbr.rel (%p325) target = $region24
        $region23: #{block_forward.1} parent=11 // pred_region
          _
        $region24: #{block_forward.1} parent=11 // pred_fallthru
          _
        // Predicated region
        $region25: #{block_forward.1} parent=11 // pred_check
          %p328 = pneg %p131
        $region26: #{block_forward.1} parent=11 // pred_check_branch
          %330 = sbr.rel (%p328) target = $region28
        $region27: #{block_forward.1} parent=11 // pred_region
          _
        $region28: #{block_forward.1} parent=11 // pred_fallthru
          _
        // Predicated region
        $region29: #{block_forward.1} parent=11 // pred_check
          %p331 = pneg %p152
        $region30: #{block_forward.1} parent=11 // pred_check_branch
          %333 = sbr.rel (%p331) target = $region32
        $region31: #{block_forward.1} parent=11 // pred_region
          _
        $region32: #{block_forward.1} parent=11 // pred_fallthru
          _
        // Predicated region
        $region33: #{block_forward.1} parent=11 // pred_check
          %p334 = pneg %p173
        $region34: #{block_forward.1} parent=11 // pred_check_branch
          %336 = sbr.rel (%p334) target = $region36
        $region35: #{block_forward.1} parent=11 // pred_region
          _
        $region36: #{block_forward.1} parent=11 // pred_fallthru
          _
        // Predicated region
        $region37: #{block_forward.1} parent=11 // pred_check
          %p337 = pneg %p194
        $region38: #{block_forward.1} parent=11 // pred_check_branch
          %339 = sbr.rel (%p337) target = $region40
        $region39: #{block_forward.1} parent=11 // pred_region
          _
        $region40: #{block_forward.1} parent=11 // pred_fallthru
          _
        // Predicated region
        $region41: #{block_forward.1} parent=11 // pred_check
          %p340 = pneg %p215
        $region42: #{block_forward.1} parent=11 // pred_check_branch
          %342 = sbr.rel (%p340) target = $region44
        $region43: #{block_forward.1} parent=11 // pred_region
          _
        $region44: #{block_forward.1} parent=11 // pred_fallthru
          _
        // Predicated region
        $region45: #{block_forward.1} parent=11 // pred_check
          %p343 = pneg %p236
        $region46: #{block_forward.1} parent=11 // pred_check_branch
          %345 = sbr.rel (%p343) target = $region48
        $region47: #{block_forward.1} parent=11 // pred_region
          _
        $region48: #{block_forward.1} parent=11 // pred_fallthru
          _
        // Predicated region
        $region49: #{block_forward.1} parent=11 // pred_check
          %p346 = pneg %p257
        $region50: #{block_forward.1} parent=11 // pred_check_branch
          %348 = sbr.rel (%p346) target = $region52
        $region51: #{block_forward.1} parent=11 // pred_region
          _
        $region52: #{block_forward.1} parent=11 // pred_fallthru
          _
        // Predicated region
        $region53: #{block_forward.1} parent=11 // pred_check
          %p349 = pneg %p278
        $region54: #{block_forward.1} parent=11 // pred_check_branch
          %351 = sbr.rel (%p349) target = $region56
        $region55: #{block_forward.1} parent=11 // pred_region
          _
        $region56: #{block_forward.1} parent=11 // pred_fallthru
          _
      $region12: #{block_forward.1} parent=5 // pred_fallthru
        _
      %p352 = scmp.lt.s32.totalorder %s21, 2
      // Predicated region
      $region57: #{block_forward.1} parent=5 // pred_check
        %p353 = pneg %p352
      $region58: #{block_forward.1} parent=5 // pred_check_branch
        %355 = sbr.rel (%p353) target = $region60
      $region59: #{block_forward.1} parent=5 // pred_region
        // Predicated region
        $region61: #{block_forward.1} parent=59 // pred_check
          %p356 = pneg %p41
        $region62: #{block_forward.1} parent=59 // pred_check_branch
          %358 = sbr.rel (%p356) target = $region64
        $region63: #{block_forward.1} parent=59 // pred_region
          %p359 = scmp.lt.s32.totalorder %s21, 1
          %s360 = scalar_select %p359, %s21, 1
          %s361 = smul.addr %s360, 8
          %s362 = scalar_lea.vmem %s0, %s361
        $region64: #{block_forward.1} parent=59 // pred_fallthru
          _
      $region60: #{block_forward.1} parent=5 // pred_fallthru
        _
      %p363 = scmp.le.s32.totalorder 1, %s21
      %p364 = scmp.lt.s32.totalorder %s21, 3
      %p365 = pnand %p363, %p364
      %p366 = pneg %p365
      // Predicated region
      $region65: #{block_forward.1} parent=5 // pred_check
        _
      $region66: #{block_forward.1} parent=5 // pred_check_branch
        %368 = sbr.rel (%p365) target = $region68
      $region67: #{block_forward.1} parent=5 // pred_region
        %s369 = ssub.s32 %s21, 1
        %p370 = scmp.lt.s32.totalorder %s26, 1
        %s371 = scalar_select %p370, %s26, 1
        %s372 = smul.addr %s371, 8
        %s373 = scalar_lea.vmem %s0, %s372
        %p374 = pneg %p47
        %p375 = pneg %p44
        %p376 = pneg %p68
        %p377 = pneg %p65
        %p378 = pneg %p89
        %p379 = pneg %p86
        %p380 = pneg %p110
        %p381 = pneg %p107
        %p382 = pneg %p131
        %p383 = pneg %p128
        %p384 = pneg %p152
        %p385 = pneg %p149
        %p386 = pneg %p173
        %p387 = pneg %p170
        %p388 = pneg %p194
        %p389 = pneg %p191
        %p390 = pneg %p215
        %p391 = pneg %p212
        %p392 = pneg %p236
        %p393 = pneg %p233
        %p394 = pneg %p257
        %p395 = pneg %p254
        %p396 = pneg %p278
        %p397 = pneg %p275
        %p398 = pneg %p304
        %p399 = pneg %p301
        %s400 = sand.u32 %s291, 1
        %s401 = scalar_lea.sflag [#allocation3], %s400
        %s402 = sand.u32 %s291, 1
        %s403 = smul.addr %s402, 8
        %s404 = scalar_lea.vmem [#allocation2], %s403
        %p405 = scmp.lt.s32.totalorder %s26, 1
        %s406 = scalar_select %p405, %s26, 1
        %s407 = smul.addr %s406, 8
        %s408 = scalar_lea.vmem %s0, %s407
        %v410 = vld [vmem:[%s408] sm:$0xff]
        %v411 = vld [vmem:[%s1] sm:$0x1]
        %v412 = vld [vmem:[%s2] sm:$0x1]
        %vm413 = vcmask 261120
        %v414 = vsel %vm413, %v410, 0.0
        %415 = vadd.xlane.f32.xlu0 %v414
        %v416 = vpop.xlane.xlu0 %415
        %v417 = vrcp.pop 32.0
        %v418 = vmul.f32 32.0, %v417
        %v419 = vsub.f32 1.0, %v418
        %v420 = vmul.f32 %v417, %v419
        %v421 = vadd.f32 %v417, %v420
        %vm422 = vweird.f32 %v417
        %v423 = vsel %vm422, %v417, %v421
        %v424 = vmul.f32 %v416, %v423
        %v425 = vsub.f32 %v410, %v424
        %v426 = vmul.f32 %v425, %v425
        %v427 = vsel %vm413, %v426, 0.0
        %428 = vadd.xlane.f32.xlu0 %v427
        %v429 = vpop.xlane.xlu0 %428
        %v430 = vmul.f32 %v429, %v423
        %v431 = vadd.f32 %v430, 1e-05
        %v432 = vrsqrt.pop %v431
        %v433 = vmul.f32 %v432, %v431
        %v434 = vmul.f32 %v433, %v432
        %v435 = vmul.f32 0.5, %v434
        %v436 = vsub.f32 1.5, %v435
        %v437 = vmul.f32 %v432, %v436
        %vm438 = vweird.f32 %v431
        %vm439 = vweird.f32 %v432
        %vm440 = vmor %vm438, %vm439
        %v441 = vsel %vm440, %v432, %v437
        %v442 = vmul.f32 %v425, %v441
        %v444 = vperm.slane %v411, 0
        %v446 = vmul.f32 %v442, %v444
        %v448 = vperm.slane %v412, 0
        %v450 = vadd.f32 %v446, %v448
        %v451 = vpack.c.bf16 %v450, %v450
        %v452 = vld [vmem:[%s3] sm:$0xf]
        %v453 = vld [vmem:[%s3 + $0x4] sm:$0xf]
        %v454 = vld [vmem:[%s3 + $0x8] sm:$0xf]
        %v455 = vld [vmem:[%s3 + $0xc] sm:$0xf]
        %v456 = vld [vmem:[%s3 + $0x10] sm:$0xf]
        %v457 = vld [vmem:[%s3 + $0x14] sm:$0xf]
        %v458 = vld [vmem:[%s3 + $0x18] sm:$0xf]
        %v459 = vld [vmem:[%s3 + $0x1c] sm:$0xf]
        %v460 = vld [vmem:[%s3 + $0x20] sm:$0xf]
        %v461 = vld [vmem:[%s3 + $0x24] sm:$0xf]
        %v462 = vld [vmem:[%s3 + $0x28] sm:$0xf]
        %v463 = vld [vmem:[%s3 + $0x2c] sm:$0xf]
        %v464 = vld [vmem:[%s3 + $0x30] sm:$0xf]
        %v465 = vld [vmem:[%s3 + $0x34] sm:$0xf]
        %v466 = vld [vmem:[%s3 + $0x38] sm:$0xf]
        %v467 = vld [vmem:[%s3 + $0x3c] sm:$0xf]
        %v468 = vld [vmem:[%s3 + $0x40] sm:$0xf]
        %v469 = vld [vmem:[%s3 + $0x44] sm:$0xf]
        %v470 = vld [vmem:[%s3 + $0x48] sm:$0xf]
        %v471 = vld [vmem:[%s3 + $0x4c] sm:$0xf]
        %v472 = vld [vmem:[%s3 + $0x50] sm:$0xf]
        %v473 = vld [vmem:[%s3 + $0x54] sm:$0xf]
        %v474 = vld [vmem:[%s3 + $0x58] sm:$0xf]
        %v475 = vld [vmem:[%s3 + $0x5c] sm:$0xf]
        %v476 = vld [vmem:[%s3 + $0x60] sm:$0xf]
        %v477 = vld [vmem:[%s3 + $0x64] sm:$0xf]
        %v478 = vld [vmem:[%s3 + $0x68] sm:$0xf]
        %v479 = vld [vmem:[%s3 + $0x6c] sm:$0xf]
        %v480 = vld [vmem:[%s3 + $0x70] sm:$0xf]
        %v481 = vld [vmem:[%s3 + $0x74] sm:$0xf]
        %v482 = vld [vmem:[%s3 + $0x78] sm:$0xf]
        %v483 = vld [vmem:[%s3 + $0x7c] sm:$0xf]
        %v484 = vld [vmem:[%s3 + $0x80] sm:$0xf]
        %v485 = vld [vmem:[%s3 + $0x84] sm:$0xf]
        %v486 = vld [vmem:[%s3 + $0x88] sm:$0xf]
        %v487 = vld [vmem:[%s3 + $0x8c] sm:$0xf]
        %v488 = vld [vmem:[%s3 + $0x90] sm:$0xf]
        %v489 = vld [vmem:[%s3 + $0x94] sm:$0xf]
        %v490 = vld [vmem:[%s3 + $0x98] sm:$0xf]
        %v491 = vld [vmem:[%s3 + $0x9c] sm:$0xf]
        %v492 = vld [vmem:[%s3 + $0xa0] sm:$0xf]
        %v493 = vld [vmem:[%s3 + $0xa4] sm:$0xf]
        %v494 = vld [vmem:[%s3 + $0xa8] sm:$0xf]
        %v495 = vld [vmem:[%s3 + $0xac] sm:$0xf]
        %v496 = vld [vmem:[%s3 + $0xb0] sm:$0xf]
        %v497 = vld [vmem:[%s3 + $0xb4] sm:$0xf]
        %v498 = vld [vmem:[%s3 + $0xb8] sm:$0xf]
        %v499 = vld [vmem:[%s3 + $0xbc] sm:$0xf]
        %v504 = vunpack.c.l.b16 %v452
        %v505 = vunpack.c.l.b16 %v453
        %v506 = vunpack.c.l.b16 %v454
        %v507 = vunpack.c.l.b16 %v455
        %v508 = vpack.c.b16 %v505, %v504
        %v509 = vpack.c.b16 %v507, %v506
        %v513 = vsel %vm413, %v451, 0
        %515 = vmatpush.bf16.msra.mxu0 0
        %516 = vmatpush.bf16.msra.mxu0 0
        %517 = vmatpush.bf16.msra.mxu0 0
        %518 = vmatpush.bf16.msra.mxu0 0
        %519 = vmatpush.bf16.msra.mxu0 0
        %520 = vmatpush.bf16.msra.mxu0 0
        %521 = vmatpush.bf16.msra.mxu0 %v509
        %522 = vmatpush.bf16.msra.mxu0 %v508
        %523 = vmatmul.bf16.gmra.mxu0 %v513
        %v524 = vpop.f32.mrf.mxu0
        %v525 = vadd.f32 0.0, %v524
        %v526 = vpop.f32.mrf.mxu0
        %527 = vdwg.mxu0
        %v532 = vunpack.c.l.b16 %v456
        %v533 = vunpack.c.l.b16 %v457
        %v534 = vunpack.c.l.b16 %v458
        %v535 = vunpack.c.l.b16 %v459
        %v536 = vpack.c.b16 %v533, %v532
        %v537 = vpack.c.b16 %v535, %v534
        %540 = vmatpush.bf16.msra.mxu0 0
        %541 = vmatpush.bf16.msra.mxu0 0
        %542 = vmatpush.bf16.msra.mxu0 0
        %543 = vmatpush.bf16.msra.mxu0 0
        %544 = vmatpush.bf16.msra.mxu0 0
        %545 = vmatpush.bf16.msra.mxu0 0
        %546 = vmatpush.bf16.msra.mxu0 %v537
        %547 = vmatpush.bf16.msra.mxu0 %v536
        %548 = vmatmul.bf16.gmra.mxu0 %v513
        %v549 = vpop.f32.mrf.mxu0
        %v550 = vadd.f32 0.0, %v549
        %v551 = vpop.f32.mrf.mxu0
        %552 = vdwg.mxu0
        %v557 = vunpack.c.l.b16 %v460
        %v558 = vunpack.c.l.b16 %v461
        %v559 = vunpack.c.l.b16 %v462
        %v560 = vunpack.c.l.b16 %v463
        %v561 = vpack.c.b16 %v558, %v557
        %v562 = vpack.c.b16 %v560, %v559
        %565 = vmatpush.bf16.msra.mxu0 0
        %566 = vmatpush.bf16.msra.mxu0 0
        %567 = vmatpush.bf16.msra.mxu0 0
        %568 = vmatpush.bf16.msra.mxu0 0
        %569 = vmatpush.bf16.msra.mxu0 0
        %570 = vmatpush.bf16.msra.mxu0 0
        %571 = vmatpush.bf16.msra.mxu0 %v562
        %572 = vmatpush.bf16.msra.mxu0 %v561
        %573 = vmatmul.bf16.gmra.mxu0 %v513
        %v574 = vpop.f32.mrf.mxu0
        %v575 = vadd.f32 0.0, %v574
        %v576 = vpop.f32.mrf.mxu0
        %577 = vdwg.mxu0
        %v582 = vunpack.c.l.b16 %v464
        %v583 = vunpack.c.l.b16 %v465
        %v584 = vunpack.c.l.b16 %v466
        %v585 = vunpack.c.l.b16 %v467
        %v586 = vpack.c.b16 %v583, %v582
        %v587 = vpack.c.b16 %v585, %v584
        %590 = vmatpush.bf16.msra.mxu0 0
        %591 = vmatpush.bf16.msra.mxu0 0
        %592 = vmatpush.bf16.msra.mxu0 0
        %593 = vmatpush.bf16.msra.mxu0 0
        %594 = vmatpush.bf16.msra.mxu0 0
        %595 = vmatpush.bf16.msra.mxu0 0
        %596 = vmatpush.bf16.msra.mxu0 %v587
        %597 = vmatpush.bf16.msra.mxu0 %v586
        %598 = vmatmul.bf16.gmra.mxu0 %v513
        %v599 = vpop.f32.mrf.mxu0
        %v600 = vadd.f32 0.0, %v599
        %v601 = vpop.f32.mrf.mxu0
        %602 = vdwg.mxu0
        %v607 = vunpack.c.l.b16 %v468
        %v608 = vunpack.c.l.b16 %v469
        %v609 = vunpack.c.l.b16 %v470
        %v610 = vunpack.c.l.b16 %v471
        %v611 = vpack.c.b16 %v608, %v607
        %v612 = vpack.c.b16 %v610, %v609
        %615 = vmatpush.bf16.msra.mxu0 0
        %616 = vmatpush.bf16.msra.mxu0 0
        %617 = vmatpush.bf16.msra.mxu0 0
        %618 = vmatpush.bf16.msra.mxu0 0
        %619 = vmatpush.bf16.msra.mxu0 0
        %620 = vmatpush.bf16.msra.mxu0 0
        %621 = vmatpush.bf16.msra.mxu0 %v612
        %622 = vmatpush.bf16.msra.mxu0 %v611
        %623 = vmatmul.bf16.gmra.mxu0 %v513
        %v624 = vpop.f32.mrf.mxu0
        %v625 = vadd.f32 0.0, %v624
        %v626 = vpop.f32.mrf.mxu0
        %627 = vdwg.mxu0
        %v632 = vunpack.c.l.b16 %v472
        %v633 = vunpack.c.l.b16 %v473
        %v634 = vunpack.c.l.b16 %v474
        %v635 = vunpack.c.l.b16 %v475
        %v636 = vpack.c.b16 %v633, %v632
        %v637 = vpack.c.b16 %v635, %v634
        %640 = vmatpush.bf16.msra.mxu0 0
        %641 = vmatpush.bf16.msra.mxu0 0
        %642 = vmatpush.bf16.msra.mxu0 0
        %643 = vmatpush.bf16.msra.mxu0 0
        %644 = vmatpush.bf16.msra.mxu0 0
        %645 = vmatpush.bf16.msra.mxu0 0
        %646 = vmatpush.bf16.msra.mxu0 %v637
        %647 = vmatpush.bf16.msra.mxu0 %v636
        %648 = vmatmul.bf16.gmra.mxu0 %v513
        %v649 = vpop.f32.mrf.mxu0
        %v650 = vadd.f32 0.0, %v649
        %v651 = vpop.f32.mrf.mxu0
        %652 = vdwg.mxu0
        %v657 = vunpack.c.l.b16 %v476
        %v658 = vunpack.c.l.b16 %v477
        %v659 = vunpack.c.l.b16 %v478
        %v660 = vunpack.c.l.b16 %v479
        %v661 = vpack.c.b16 %v658, %v657
        %v662 = vpack.c.b16 %v660, %v659
        %665 = vmatpush.bf16.msra.mxu0 0
        %666 = vmatpush.bf16.msra.mxu0 0
        %667 = vmatpush.bf16.msra.mxu0 0
        %668 = vmatpush.bf16.msra.mxu0 0
        %669 = vmatpush.bf16.msra.mxu0 0
        %670 = vmatpush.bf16.msra.mxu0 0
        %671 = vmatpush.bf16.msra.mxu0 %v662
        %672 = vmatpush.bf16.msra.mxu0 %v661
        %673 = vmatmul.bf16.gmra.mxu0 %v513
        %v674 = vpop.f32.mrf.mxu0
        %v675 = vadd.f32 0.0, %v674
        %v676 = vpop.f32.mrf.mxu0
        %677 = vdwg.mxu0
        %v682 = vunpack.c.l.b16 %v480
        %v683 = vunpack.c.l.b16 %v481
        %v684 = vunpack.c.l.b16 %v482
        %v685 = vunpack.c.l.b16 %v483
        %v686 = vpack.c.b16 %v683, %v682
        %v687 = vpack.c.b16 %v685, %v684
        %690 = vmatpush.bf16.msra.mxu0 0
        %691 = vmatpush.bf16.msra.mxu0 0
        %692 = vmatpush.bf16.msra.mxu0 0
        %693 = vmatpush.bf16.msra.mxu0 0
        %694 = vmatpush.bf16.msra.mxu0 0
        %695 = vmatpush.bf16.msra.mxu0 0
        %696 = vmatpush.bf16.msra.mxu0 %v687
        %697 = vmatpush.bf16.msra.mxu0 %v686
        %698 = vmatmul.bf16.gmra.mxu0 %v513
        %v699 = vpop.f32.mrf.mxu0
        %v700 = vadd.f32 0.0, %v699
        %v701 = vpop.f32.mrf.mxu0
        %702 = vdwg.mxu0
        %v707 = vunpack.c.l.b16 %v484
        %v708 = vunpack.c.l.b16 %v485
        %v709 = vunpack.c.l.b16 %v486
        %v710 = vunpack.c.l.b16 %v487
        %v711 = vpack.c.b16 %v708, %v707
        %v712 = vpack.c.b16 %v710, %v709
        %715 = vmatpush.bf16.msra.mxu0 0
        %716 = vmatpush.bf16.msra.mxu0 0
        %717 = vmatpush.bf16.msra.mxu0 0
        %718 = vmatpush.bf16.msra.mxu0 0
        %719 = vmatpush.bf16.msra.mxu0 0
        %720 = vmatpush.bf16.msra.mxu0 0
        %721 = vmatpush.bf16.msra.mxu0 %v712
        %722 = vmatpush.bf16.msra.mxu0 %v711
        %723 = vmatmul.bf16.gmra.mxu0 %v513
        %v724 = vpop.f32.mrf.mxu0
        %v725 = vadd.f32 0.0, %v724
        %v726 = vpop.f32.mrf.mxu0
        %727 = vdwg.mxu0
        %v732 = vunpack.c.l.b16 %v488
        %v733 = vunpack.c.l.b16 %v489
        %v734 = vunpack.c.l.b16 %v490
        %v735 = vunpack.c.l.b16 %v491
        %v736 = vpack.c.b16 %v733, %v732
        %v737 = vpack.c.b16 %v735, %v734
        %740 = vmatpush.bf16.msra.mxu0 0
        %741 = vmatpush.bf16.msra.mxu0 0
        %742 = vmatpush.bf16.msra.mxu0 0
        %743 = vmatpush.bf16.msra.mxu0 0
        %744 = vmatpush.bf16.msra.mxu0 0
        %745 = vmatpush.bf16.msra.mxu0 0
        %746 = vmatpush.bf16.msra.mxu0 %v737
        %747 = vmatpush.bf16.msra.mxu0 %v736
        %748 = vmatmul.bf16.gmra.mxu0 %v513
        %v749 = vpop.f32.mrf.mxu0
        %v750 = vadd.f32 0.0, %v749
        %v751 = vpop.f32.mrf.mxu0
        %752 = vdwg.mxu0
        %v757 = vunpack.c.l.b16 %v492
        %v758 = vunpack.c.l.b16 %v493
        %v759 = vunpack.c.l.b16 %v494
        %v760 = vunpack.c.l.b16 %v495
        %v761 = vpack.c.b16 %v758, %v757
        %v762 = vpack.c.b16 %v760, %v759
        %765 = vmatpush.bf16.msra.mxu0 0
        %766 = vmatpush.bf16.msra.mxu0 0
        %767 = vmatpush.bf16.msra.mxu0 0
        %768 = vmatpush.bf16.msra.mxu0 0
        %769 = vmatpush.bf16.msra.mxu0 0
        %770 = vmatpush.bf16.msra.mxu0 0
        %771 = vmatpush.bf16.msra.mxu0 %v762
        %772 = vmatpush.bf16.msra.mxu0 %v761
        %773 = vmatmul.bf16.gmra.mxu0 %v513
        %v774 = vpop.f32.mrf.mxu0
        %v775 = vadd.f32 0.0, %v774
        %v776 = vpop.f32.mrf.mxu0
        %777 = vdwg.mxu0
        %v782 = vunpack.c.l.b16 %v496
        %v783 = vunpack.c.l.b16 %v497
        %v784 = vunpack.c.l.b16 %v498
        %v785 = vunpack.c.l.b16 %v499
        %v786 = vpack.c.b16 %v783, %v782
        %v787 = vpack.c.b16 %v785, %v784
        %790 = vmatpush.bf16.msra.mxu0 0
        %791 = vmatpush.bf16.msra.mxu0 0
        %792 = vmatpush.bf16.msra.mxu0 0
        %793 = vmatpush.bf16.msra.mxu0 0
        %794 = vmatpush.bf16.msra.mxu0 0
        %795 = vmatpush.bf16.msra.mxu0 0
        %796 = vmatpush.bf16.msra.mxu0 %v787
        %797 = vmatpush.bf16.msra.mxu0 %v786
        %798 = vmatmul.bf16.gmra.mxu0 %v513
        %v799 = vpop.f32.mrf.mxu0
        %v800 = vadd.f32 0.0, %v799
        %v801 = vpop.f32.mrf.mxu0
        %802 = vdwg.mxu0
        %v803 = vpack.c.bf16 %v525, %v525
        %v804 = vpack.c.bf16 %v550, %v550
        %v805 = vpack.c.bf16 %v575, %v575
        %v806 = vpack.c.bf16 %v600, %v600
        %v807 = vpack.c.bf16 %v625, %v625
        %v808 = vpack.c.bf16 %v650, %v650
        %v809 = vpack.c.bf16 %v675, %v675
        %v810 = vpack.c.bf16 %v700, %v700
        %vm811 = vcmask 64512
        %v813 = vsel %vm811, %v803, 0
        %v816 = vsel %vm811, %v807, 0
        %818 = vmatpush.bf16.xpose.msra.mxu0 0
        %819 = vmatpush.bf16.xpose.msra.mxu0 0
        %820 = vmatpush.bf16.xpose.msra.mxu0 0
        %821 = vmatpush.bf16.xpose.msra.mxu0 0
        %822 = vmatpush.bf16.xpose.msra.mxu0 0
        %823 = vmatpush.bf16.xpose.msra.mxu0 0
        %824 = vmatpush.bf16.xpose.msra.mxu0 0
        %825 = vmatpush.bf16.xpose.msra.mxu0 %v816
        %826 = vmatmul.bf16.gmra.mxu0 %v813
        %v827 = vpop.f32.mrf.mxu0
        %v828 = vadd.f32 0.0, %v827
        %v829 = vpop.f32.mrf.mxu0
        %830 = vdwg.mxu0
        %v832 = vsel %vm811, %v804, 0
        %v835 = vsel %vm811, %v808, 0
        %837 = vmatpush.bf16.xpose.msra.mxu0 0
        %838 = vmatpush.bf16.xpose.msra.mxu0 0
        %839 = vmatpush.bf16.xpose.msra.mxu0 0
        %840 = vmatpush.bf16.xpose.msra.mxu0 0
        %841 = vmatpush.bf16.xpose.msra.mxu0 0
        %842 = vmatpush.bf16.xpose.msra.mxu0 0
        %843 = vmatpush.bf16.xpose.msra.mxu0 0
        %844 = vmatpush.bf16.xpose.msra.mxu0 %v835
        %845 = vmatmul.bf16.gmra.mxu0 %v832
        %v846 = vpop.f32.mrf.mxu0
        %v847 = vadd.f32 0.0, %v846
        %v848 = vpop.f32.mrf.mxu0
        %849 = vdwg.mxu0
        %v851 = vsel %vm811, %v805, 0
        %v854 = vsel %vm811, %v809, 0
        %856 = vmatpush.bf16.xpose.msra.mxu0 0
        %857 = vmatpush.bf16.xpose.msra.mxu0 0
        %858 = vmatpush.bf16.xpose.msra.mxu0 0
        %859 = vmatpush.bf16.xpose.msra.mxu0 0
        %860 = vmatpush.bf16.xpose.msra.mxu0 0
        %861 = vmatpush.bf16.xpose.msra.mxu0 0
        %862 = vmatpush.bf16.xpose.msra.mxu0 0
        %863 = vmatpush.bf16.xpose.msra.mxu0 %v854
        %864 = vmatmul.bf16.gmra.mxu0 %v851
        %v865 = vpop.f32.mrf.mxu0
        %v866 = vadd.f32 0.0, %v865
        %v867 = vpop.f32.mrf.mxu0
        %868 = vdwg.mxu0
        %v870 = vsel %vm811, %v806, 0
        %v873 = vsel %vm811, %v810, 0
        %875 = vmatpush.bf16.xpose.msra.mxu0 0
        %876 = vmatpush.bf16.xpose.msra.mxu0 0
        %877 = vmatpush.bf16.xpose.msra.mxu0 0
        %878 = vmatpush.bf16.xpose.msra.mxu0 0
        %879 = vmatpush.bf16.xpose.msra.mxu0 0
        %880 = vmatpush.bf16.xpose.msra.mxu0 0
        %881 = vmatpush.bf16.xpose.msra.mxu0 0
        %882 = vmatpush.bf16.xpose.msra.mxu0 %v873
        %883 = vmatmul.bf16.gmra.mxu0 %v870
        %v884 = vpop.f32.mrf.mxu0
        %v885 = vadd.f32 0.0, %v884
        %v886 = vpop.f32.mrf.mxu0
        %887 = vdwg.mxu0
        %v888 = vmul.f32 %v828, 0.17677669
        %v889 = vmul.f32 %v847, 0.17677669
        %v890 = vmul.f32 %v866, 0.17677669
        %v891 = vmul.f32 %v885, 0.17677669
        %v892 = vlaneseq
        %v893 = vshrl.u32 %v892, 7
        %v894 = vlaneseq
        %v895 = vand.u32 %v894, 127
        %vm896 = vcmp.le.s32.totalorder %v895, %v893
        %v897 = vsel %vm896, 1, 0
        %vm898 = vcmp.eq.s32.totalorder %v897, 1
        %v899 = vsel %vm898, %v888, -1e+30
        %v900 = vsel %vm898, %v889, -1e+30
        %v901 = vsel %vm898, %v890, -1e+30
        %v902 = vsel %vm898, %v891, -1e+30
        %v903 = vsel %vm811, %v899, -inf
        %904 = vmax.xlane.f32.xlu0 %v903
        %v905 = vpop.xlane.xlu0 %904
        %v906 = vsel %vm811, %v900, -inf
        %907 = vmax.xlane.f32.xlu0 %v906
        %v908 = vpop.xlane.xlu0 %907
        %v909 = vsel %vm811, %v901, -inf
        %910 = vmax.xlane.f32.xlu0 %v909
        %v911 = vpop.xlane.xlu0 %910
        %v912 = vsel %vm811, %v902, -inf
        %913 = vmax.xlane.f32.xlu0 %v912
        %v914 = vpop.xlane.xlu0 %913
        %v915 = vsub.f32 %v899, %v905
        %v916 = vsub.f32 %v900, %v908
        %v917 = vsub.f32 %v901, %v911
        %v918 = vsub.f32 %v902, %v914
        %v919 = vmul.f32 %v915, 1.442695
        %v920 = vpow.pop %v919
        %v921 = vmul.f32 %v916, 1.442695
        %v922 = vpow.pop %v921
        %v923 = vmul.f32 %v917, 1.442695
        %v924 = vpow.pop %v923
        %v925 = vmul.f32 %v918, 1.442695
        %v926 = vpow.pop %v925
        %v927 = vsel %vm811, %v920, 0.0
        %928 = vadd.xlane.f32.xlu0 %v927
        %v929 = vpop.xlane.xlu0 %928
        %v930 = vsel %vm811, %v922, 0.0
        %931 = vadd.xlane.f32.xlu0 %v930
        %v932 = vpop.xlane.xlu0 %931
        %v933 = vsel %vm811, %v924, 0.0
        %934 = vadd.xlane.f32.xlu0 %v933
        %v935 = vpop.xlane.xlu0 %934
        %v936 = vsel %vm811, %v926, 0.0
        %937 = vadd.xlane.f32.xlu0 %v936
        %v938 = vpop.xlane.xlu0 %937
        %v939 = vrcp.pop %v929
        %v940 = vrcp.pop %v932
        %v941 = vrcp.pop %v935
        %v942 = vrcp.pop %v938
        %v943 = vmul.f32 %v929, %v939
        %v944 = vmul.f32 %v932, %v940
        %v945 = vmul.f32 %v935, %v941
        %v946 = vmul.f32 %v938, %v942
        %v947 = vsub.f32 2.0, %v943
        %v948 = vsub.f32 2.0, %v944
        %v949 = vsub.f32 2.0, %v945
        %v950 = vsub.f32 2.0, %v946
        %v951 = vmul.f32 %v939, %v947
        %v952 = vmul.f32 %v940, %v948
        %v953 = vmul.f32 %v941, %v949
        %v954 = vmul.f32 %v942, %v950
        %v955 = vpack.c.bf16 %v920, %v920
        %v956 = vpack.c.bf16 %v922, %v922
        %v957 = vpack.c.bf16 %v924, %v924
        %v958 = vpack.c.bf16 %v926, %v926
        %v959 = vpack.c.bf16 %v725, %v725
        %v960 = vpack.c.bf16 %v750, %v750
        %v961 = vpack.c.bf16 %v775, %v775
        %v962 = vpack.c.bf16 %v800, %v800
        %v964 = vsel %vm811, %v955, 0
        %vm966 = vcmask 1043456
        %v968 = vsel %vm966, %v959, 0
        %970 = vmatpush.bf16.msra.mxu0 0
        %971 = vmatpush.bf16.msra.mxu0 0
        %972 = vmatpush.bf16.msra.mxu0 0
        %973 = vmatpush.bf16.msra.mxu0 0
        %974 = vmatpush.bf16.msra.mxu0 0
        %975 = vmatpush.bf16.msra.mxu0 0
        %976 = vmatpush.bf16.msra.mxu0 0
        %977 = vmatpush.bf16.msra.mxu0 %v968
        %978 = vmatmul.bf16.gmra.mxu0 %v964
        %v979 = vpop.f32.mrf.mxu0
        %v980 = vadd.f32 0.0, %v979
        %v981 = vpop.f32.mrf.mxu0
        %982 = vdwg.mxu0
        %v984 = vsel %vm811, %v956, 0
        %v987 = vsel %vm966, %v960, 0
        %989 = vmatpush.bf16.msra.mxu0 0
        %990 = vmatpush.bf16.msra.mxu0 0
        %991 = vmatpush.bf16.msra.mxu0 0
        %992 = vmatpush.bf16.msra.mxu0 0
        %993 = vmatpush.bf16.msra.mxu0 0
        %994 = vmatpush.bf16.msra.mxu0 0
        %995 = vmatpush.bf16.msra.mxu0 0
        %996 = vmatpush.bf16.msra.mxu0 %v987
        %997 = vmatmul.bf16.gmra.mxu0 %v984
        %v998 = vpop.f32.mrf.mxu0
        %v999 = vadd.f32 0.0, %v998
        %v1000 = vpop.f32.mrf.mxu0
        %1001 = vdwg.mxu0
        %v1003 = vsel %vm811, %v957, 0
        %v1006 = vsel %vm966, %v961, 0
        %1008 = vmatpush.bf16.msra.mxu0 0
        %1009 = vmatpush.bf16.msra.mxu0 0
        %1010 = vmatpush.bf16.msra.mxu0 0
        %1011 = vmatpush.bf16.msra.mxu0 0
        %1012 = vmatpush.bf16.msra.mxu0 0
        %1013 = vmatpush.bf16.msra.mxu0 0
        %1014 = vmatpush.bf16.msra.mxu0 0
        %1015 = vmatpush.bf16.msra.mxu0 %v1006
        %1016 = vmatmul.bf16.gmra.mxu0 %v1003
        %v1017 = vpop.f32.mrf.mxu0
        %v1018 = vadd.f32 0.0, %v1017
        %v1019 = vpop.f32.mrf.mxu0
        %1020 = vdwg.mxu0
        %v1022 = vsel %vm811, %v958, 0
        %v1025 = vsel %vm966, %v962, 0
        %1027 = vmatpush.bf16.msra.mxu0 0
        %1028 = vmatpush.bf16.msra.mxu0 0
        %1029 = vmatpush.bf16.msra.mxu0 0
        %1030 = vmatpush.bf16.msra.mxu0 0
        %1031 = vmatpush.bf16.msra.mxu0 0
        %1032 = vmatpush.bf16.msra.mxu0 0
        %1033 = vmatpush.bf16.msra.mxu0 0
        %1034 = vmatpush.bf16.msra.mxu0 %v1025
        %1035 = vmatmul.bf16.gmra.mxu0 %v1022
        %v1036 = vpop.f32.mrf.mxu0
        %v1037 = vadd.f32 0.0, %v1036
        %v1038 = vpop.f32.mrf.mxu0
        %1039 = vdwg.mxu0
        %v1040 = vmul.f32 %v980, %v951
        %v1041 = vmul.f32 %v999, %v952
        %v1042 = vmul.f32 %v1018, %v953
        %v1043 = vmul.f32 %v1037, %v954
        %v1044 = vpack.c.bf16 %v1040, %v1040
        %v1045 = vpack.c.bf16 %v1041, %v1041
        %v1046 = vpack.c.bf16 %v1042, %v1042
        %v1047 = vpack.c.bf16 %v1043, %v1043
        %v1048 = vld [vmem:[%s4] sm:$0xf]
        %v1049 = vld [vmem:[%s4 + $0x4] sm:$0xf]
        %v1050 = vld [vmem:[%s4 + $0x8] sm:$0xf]
        %v1051 = vld [vmem:[%s4 + $0xc] sm:$0xf]
        %v1053 = vsel %vm811, %v1044, 0
        %v1056 = vsel %vm966, %v1048, 0
        %1058 = vmatpush.bf16.msra.mxu0 0
        %1059 = vmatpush.bf16.msra.mxu0 0
        %1060 = vmatpush.bf16.msra.mxu0 0
        %1061 = vmatpush.bf16.msra.mxu0 0
        %1062 = vmatpush.bf16.msra.mxu0 0
        %1063 = vmatpush.bf16.msra.mxu0 0
        %1064 = vmatpush.bf16.msra.mxu0 0
        %1065 = vmatpush.bf16.msra.mxu0 %v1056
        %1066 = vmatmul.bf16.gmra.mxu0 %v1053
        %v1067 = vpop.f32.mrf.mxu0
        %v1068 = vadd.f32 0.0, %v1067
        %v1069 = vpop.f32.mrf.mxu0
        %1070 = vdwg.mxu0
        %v1072 = vsel %vm811, %v1045, 0
        %v1075 = vsel %vm966, %v1049, 0
        %1077 = vmatpush.bf16.msra.mxu0 0
        %1078 = vmatpush.bf16.msra.mxu0 0
        %1079 = vmatpush.bf16.msra.mxu0 0
        %1080 = vmatpush.bf16.msra.mxu0 0
        %1081 = vmatpush.bf16.msra.mxu0 0
        %1082 = vmatpush.bf16.msra.mxu0 0
        %1083 = vmatpush.bf16.msra.mxu0 0
        %1084 = vmatpush.bf16.msra.mxu0 %v1075
        %1085 = vmatmul.bf16.gmra.mxu0 %v1072
        %v1086 = vpop.f32.mrf.mxu0
        %v1087 = vadd.f32 0.0, %v1086
        %v1088 = vpop.f32.mrf.mxu0
        %1089 = vdwg.mxu0
        %v1091 = vsel %vm811, %v1046, 0
        %v1094 = vsel %vm966, %v1050, 0
        %1096 = vmatpush.bf16.msra.mxu0 0
        %1097 = vmatpush.bf16.msra.mxu0 0
        %1098 = vmatpush.bf16.msra.mxu0 0
        %1099 = vmatpush.bf16.msra.mxu0 0
        %1100 = vmatpush.bf16.msra.mxu0 0
        %1101 = vmatpush.bf16.msra.mxu0 0
        %1102 = vmatpush.bf16.msra.mxu0 0
        %1103 = vmatpush.bf16.msra.mxu0 %v1094
        %1104 = vmatmul.bf16.gmra.mxu0 %v1091
        %v1105 = vpop.f32.mrf.mxu0
        %v1106 = vadd.f32 0.0, %v1105
        %v1107 = vpop.f32.mrf.mxu0
        %1108 = vdwg.mxu0
        %v1110 = vsel %vm811, %v1047, 0
        %v1113 = vsel %vm966, %v1051, 0
        %1115 = vmatpush.bf16.msra.mxu0 0
        %1116 = vmatpush.bf16.msra.mxu0 0
        %1117 = vmatpush.bf16.msra.mxu0 0
        %1118 = vmatpush.bf16.msra.mxu0 0
        %1119 = vmatpush.bf16.msra.mxu0 0
        %1120 = vmatpush.bf16.msra.mxu0 0
        %1121 = vmatpush.bf16.msra.mxu0 0
        %1122 = vmatpush.bf16.msra.mxu0 %v1113
        %1123 = vmatmul.bf16.gmra.mxu0 %v1110
        %v1124 = vpop.f32.mrf.mxu0
        %v1125 = vadd.f32 0.0, %v1124
        %v1126 = vpop.f32.mrf.mxu0
        %1127 = vdwg.mxu0
        %v1128 = vsel %vm413, %v1068, 0.0
        %v1129 = vsel %vm413, %v1087, 0.0
        %v1130 = vadd.f32 %v1128, %v1129
        %v1131 = vsel %vm413, %v1106, 0.0
        %v1132 = vadd.f32 %v1130, %v1131
        %v1133 = vsel %vm413, %v1125, 0.0
        %v1134 = vadd.f32 %v1132, %v1133
        %v1135 = vld [vmem:[%s5] sm:$0x1]
        %v1137 = vperm.slane %v1135, 0
        %v1139 = vadd.f32 %v1134, %v1137
        %v1140 = vadd.f32 %v410, %v1139
        %v1141 = vld [vmem:[%s6] sm:$0x1]
        %v1142 = vld [vmem:[%s7] sm:$0x1]
        %v1143 = vsel %vm413, %v1140, 0.0
        %1144 = vadd.xlane.f32.xlu0 %v1143
        %v1145 = vpop.xlane.xlu0 %1144
        %v1146 = vmul.f32 %v1145, %v423
        %v1147 = vsub.f32 %v1140, %v1146
        %v1148 = vmul.f32 %v1147, %v1147
        %v1149 = vsel %vm413, %v1148, 0.0
        %1150 = vadd.xlane.f32.xlu0 %v1149
        %v1151 = vpop.xlane.xlu0 %1150
        %v1152 = vmul.f32 %v1151, %v423
        %v1153 = vadd.f32 %v1152, 1e-05
        %v1154 = vrsqrt.pop %v1153
        %v1155 = vmul.f32 %v1154, %v1153
        %v1156 = vmul.f32 %v1155, %v1154
        %v1157 = vmul.f32 0.5, %v1156
        %v1158 = vsub.f32 1.5, %v1157
        %v1159 = vmul.f32 %v1154, %v1158
        %vm1160 = vweird.f32 %v1153
        %vm1161 = vweird.f32 %v1154
        %vm1162 = vmor %vm1160, %vm1161
        %v1163 = vsel %vm1162, %v1154, %v1159
        %v1164 = vmul.f32 %v1147, %v1163
        %v1166 = vperm.slane %v1141, 0
        %v1168 = vmul.f32 %v1164, %v1166
        %v1170 = vperm.slane %v1142, 0
        %v1172 = vadd.f32 %v1168, %v1170
        %v1173 = vpack.c.bf16 %v1172, %v1172
        %v1174 = vld [vmem:[%s8] sm:$0xf]
        %v1175 = vld [vmem:[%s8 + $0x4] sm:$0xf]
        %v1176 = vld [vmem:[%s8 + $0x8] sm:$0xf]
        %v1177 = vld [vmem:[%s8 + $0xc] sm:$0xf]
        %v1178 = vld [vmem:[%s9] sm:$0x1]
        %v1180 = vperm.slane %v1178, 0
        %v1186 = vunpack.c.l.b16 %v1174
        %v1187 = vunpack.c.l.b16 %v1175
        %v1188 = vunpack.c.l.b16 %v1176
        %v1189 = vunpack.c.l.b16 %v1177
        %v1190 = vpack.c.b16 %v1187, %v1186
        %v1191 = vpack.c.b16 %v1189, %v1188
        %v1195 = vsel %vm413, %v1173, 0
        %1197 = vmatpush.bf16.msra.mxu0 0
        %1198 = vmatpush.bf16.msra.mxu0 0
        %1199 = vmatpush.bf16.msra.mxu0 0
        %1200 = vmatpush.bf16.msra.mxu0 0
        %1201 = vmatpush.bf16.msra.mxu0 0
        %1202 = vmatpush.bf16.msra.mxu0 0
        %1203 = vmatpush.bf16.msra.mxu0 %v1191
        %1204 = vmatpush.bf16.msra.mxu0 %v1190
        %1205 = vmatmul.bf16.gmra.mxu0 %v1195
        %v1206 = vpop.f32.mrf.mxu0
        %v1207 = vadd.f32 %v1180, %v1206
        %v1208 = vpop.f32.mrf.mxu0
        %1209 = vdwg.mxu0
        %v1210 = vmax.f32 %v1207, 0.0
        %v1211 = vpack.c.bf16 %v1210, %v1210
        %v1212 = vld [vmem:[%s10] sm:$0xf]
        %v1213 = vld [vmem:[%s10 + $0x4] sm:$0xf]
        %v1214 = vld [vmem:[%s10 + $0x8] sm:$0xf]
        %v1215 = vld [vmem:[%s10 + $0xc] sm:$0xf]
        %v1216 = vld [vmem:[%s10 + $0x10] sm:$0xf]
        %v1217 = vld [vmem:[%s10 + $0x14] sm:$0xf]
        %v1218 = vld [vmem:[%s10 + $0x18] sm:$0xf]
        %v1219 = vld [vmem:[%s10 + $0x1c] sm:$0xf]
        %v1220 = vld [vmem:[%s10 + $0x20] sm:$0xf]
        %v1221 = vld [vmem:[%s10 + $0x24] sm:$0xf]
        %v1222 = vld [vmem:[%s10 + $0x28] sm:$0xf]
        %v1223 = vld [vmem:[%s10 + $0x2c] sm:$0xf]
        %v1224 = vld [vmem:[%s10 + $0x30] sm:$0xf]
        %v1225 = vld [vmem:[%s10 + $0x34] sm:$0xf]
        %v1226 = vld [vmem:[%s10 + $0x38] sm:$0xf]
        %v1227 = vld [vmem:[%s10 + $0x3c] sm:$0xf]
        %v1228 = vld [vmem:[%s11] sm:$0x1]
        %v1230 = vperm.slane %v1228, 0
        %v1248 = vunpack.c.l.b16 %v1212
        %v1249 = vunpack.c.l.b16 %v1213
        %v1250 = vunpack.c.l.b16 %v1214
        %v1251 = vunpack.c.l.b16 %v1215
        %v1252 = vunpack.c.l.b16 %v1216
        %v1253 = vunpack.c.l.b16 %v1217
        %v1254 = vunpack.c.l.b16 %v1218
        %v1255 = vunpack.c.l.b16 %v1219
        %v1256 = vunpack.c.l.b16 %v1220
        %v1257 = vunpack.c.l.b16 %v1221
        %v1258 = vunpack.c.l.b16 %v1222
        %v1259 = vunpack.c.l.b16 %v1223
        %v1260 = vunpack.c.l.b16 %v1224
        %v1261 = vunpack.c.l.b16 %v1225
        %v1262 = vunpack.c.l.b16 %v1226
        %v1263 = vunpack.c.l.b16 %v1227
        %v1264 = vpack.c.b16 %v1249, %v1248
        %v1265 = vpack.c.b16 %v1251, %v1250
        %v1266 = vpack.c.b16 %v1253, %v1252
        %v1267 = vpack.c.b16 %v1255, %v1254
        %v1268 = vpack.c.b16 %v1257, %v1256
        %v1269 = vpack.c.b16 %v1259, %v1258
        %v1270 = vpack.c.b16 %v1261, %v1260
        %v1271 = vpack.c.b16 %v1263, %v1262
        %1280 = vmatpush.bf16.msra.mxu0 %v1271
        %1281 = vmatpush.bf16.msra.mxu0 %v1270
        %1282 = vmatpush.bf16.msra.mxu0 %v1269
        %1283 = vmatpush.bf16.msra.mxu0 %v1268
        %1284 = vmatpush.bf16.msra.mxu0 %v1267
        %1285 = vmatpush.bf16.msra.mxu0 %v1266
        %1286 = vmatpush.bf16.msra.mxu0 %v1265
        %1287 = vmatpush.bf16.msra.mxu0 %v1264
        %1288 = vmatmul.bf16.gmra.mxu0 %v1211
        %v1289 = vpop.f32.mrf.mxu0
        %v1290 = vadd.f32 %v1230, %v1289
        %v1291 = vpop.f32.mrf.mxu0
        %1292 = vdwg.mxu0
        %v1293 = vadd.f32 %v1140, %v1290
        %1294 = vst.msk [vmem:[%s404] sm:$0xff] %vm413, %v1293
        %s1295 = sand.u32 %s291, 1
        %s1296 = scalar_lea.sflag [#allocation3], %s1295
        %s1297 = sand.u32 %s291, 1
        %s1298 = smul.addr %s1297, 8
        %s1299 = scalar_lea.vmem [#allocation2], %s1298
        // Predicated region
        $region69: #{block_forward.1} parent=67 // pred_check
          %p1300 = pneg %p301
        $region70: #{block_forward.1} parent=67 // pred_check_branch
          %1302 = sbr.rel (%p1300) target = $region72
        $region71: #{block_forward.1} parent=67 // pred_region
          %1304 = vsyncadd %s1296, 0
          %s1305 = smul.addr %s26, 8
          %s1306 = scalar_lea.hbm %s12, %s1305
          %s1308 = sshll.u32 %s1299, 4
          %s1309 = int_to_ptr.vmem [resolvable:$true] %s1308
          %s1310 = sshll.u32 %s1306, 4
          %s1311 = int_to_ptr.hbm [resolvable:$true] %s1310
          %1313 = dma.vmem_to_hbm [thread:$0]  %s1309, 128, %s1311, %s1296
        $region72: #{block_forward.1} parent=67 // pred_fallthru
          _
      $region68: #{block_forward.1} parent=5 // pred_fallthru
        _
      %p1314 = scmp.le.s32.totalorder 2, %s21
      // Predicated region
      $region73: #{block_forward.1} parent=5 // pred_check
        %p1315 = pneg %p1314
      $region74: #{block_forward.1} parent=5 // pred_check_branch
        %1317 = sbr.rel (%p1315) target = $region76
      $region75: #{block_forward.1} parent=5 // pred_region
        %s1318 = ssub.s32 %s21, 2
        // Predicated region
        $region77: #{block_forward.1} parent=75 // pred_check
          %p1319 = pneg %p307
        $region78: #{block_forward.1} parent=75 // pred_check_branch
          %1321 = sbr.rel (%p1319) target = $region80
        $region79: #{block_forward.1} parent=75 // pred_region
          %s1322 = sand.u32 %s292, 1
          %s1323 = scalar_lea.sflag [#allocation3], %s1322
          %s1324 = sand.u32 %s292, 1
          %s1325 = smul.addr %s1324, 8
          %s1326 = scalar_lea.vmem [#allocation2], %s1325
          %1328 = dma.done %s1323, 128
        $region80: #{block_forward.1} parent=75 // pred_fallthru
          _
      $region76: #{block_forward.1} parent=5 // pred_fallthru
        _
    $region6: #{block_forward.1} parent=1 // loop_footer
      %s25 = sadd.s32 1, %s21
    $region7: #{block_forward.1} parent=1 // loop_footer_branch
      %20 = sbr.rel target = $region3
    $region8: #{block_forward.1} parent=1 // loop_exit
      _
    %1329 = vsyncpa [#allocation3], 1
    %s1330 = scalar_lea.sflag [#allocation3], 1
    %1331 = vsyncpa %s1330, 1

</llo_original>
